<compile_context>
chip_gen: v7x
topology: tpu7x:2x2x1
jax: 0.10.0
libtpu: 0.0.40
codegen_flags: <defaults>
</compile_context>

<pallas_src>
import functools

import jax
import jax.numpy as jnp
from jax.experimental import pallas as pl
from jax.experimental.pallas import tpu as pltpu

_LANE = 128
_SUBLANE = 8


def _round_up(n, m):
    return ((n + m - 1) // m) * m


def _cdiv(a, b):
    return -(-a // b)


def _pad2(a, rows, cols):
    out = jnp.zeros((rows, cols), a.dtype)
    return out.at[: a.shape[0], : a.shape[1]].set(a)


def _vmem_capacity_bytes():
    """Physical per-core VMEM (128 MiB on v5e/v6e, 64 MiB on v7x)."""
    try:
        return int(pltpu.get_tpu_info().vmem_capacity_bytes)
    except Exception:
        return 64 << 20  # conservative default (v7x)


# ----------------------------------------------------------------------------
# Fused Pallas kernel: a chunk of layers (usually the whole network)
# ----------------------------------------------------------------------------
def _mlp_chunk_kernel(*refs, skip_flags, negative_slope, activate_last,
                      act_dtype):
    """refs = (x_ref, inp_ref, <per-layer param refs...>, o_ref).

    Per layer: non-skip -> (w, b); skip -> (w_x, w_inp, b).  Weights are
    [D_in_pad, D_out_pad], biases [1, D_out_pad].  All intermediates stay in
    vregs/VMEM; only the chunk's last layer is written to HBM (lane-dense).
    """
    x_ref, inp_ref = refs[0], refs[1]
    o_ref = refs[-1]
    p_refs = refs[2:-1]

    def leaky(y):
        if 0.0 <= negative_slope <= 1.0:
            # 2 VALU ops per vreg instead of cmp+mul+select.
            return jnp.maximum(y, negative_slope * y)
        return jnp.where(y > 0, y, negative_slope * y)

    n_layers = len(skip_flags)
    cur = None  # running activation; None -> read the resident VMEM x tile
    p = 0
    for l, is_skip in enumerate(skip_flags):
        # NOTE: x_ref / inp_ref are re-read at their use sites (cheap vld from
        # resident VMEM) instead of being hoisted -> lower vreg pressure.
        if is_skip:
            w_x = p_refs[p][...]
            w_in = p_refs[p + 1][...]
            b = p_refs[p + 2][...]
            p += 3
            lhs = x_ref[...] if cur is None else cur
            # torch.cat([x, input], -1) @ W.T  ==  x @ W_x + input @ W_in
            y = jnp.dot(lhs.astype(w_x.dtype), w_x,
                        preferred_element_type=jnp.float32)
            y = y + jnp.dot(inp_ref[...].astype(w_in.dtype), w_in,
                            preferred_element_type=jnp.float32)
        else:
            w = p_refs[p][...]
            b = p_refs[p + 1][...]
            p += 2
            lhs = x_ref[...] if cur is None else cur
            y = jnp.dot(lhs.astype(w.dtype), w,
                        preferred_element_type=jnp.float32)
        y = y + b.astype(jnp.float32)                      # bias add in f32
        last = l == n_layers - 1
        if (not last) or activate_last:
            y = leaky(y)
        # Carry the inter-layer activation in act_dtype (bf16 when the weights
        # are bf16 on v6e/v7x -> halves activation footprint; f32 otherwise).
        cur = y if last else y.astype(act_dtype)
    o_ref[...] = cur.astype(o_ref.dtype)


# ----------------------------------------------------------------------------
# One-time parameter prep (plain JAX glue): transpose, split skip, zero-pad
# ----------------------------------------------------------------------------
def prepare_pallas_params(params, num_layers, skip_layer, d_in):
    """params[l] = (w [Dout, Din_total] effective weight, b [Dout]).

    Returns a flat list of padded arrays (weights [Din_pad, Dout_pad], biases
    [1, Dout_pad]) and a tuple of per-layer skip flags.  Zero padding keeps
    the math exact (padded columns/rows/bias lanes contribute 0; LReLU(0)=0).
    """
    flat = []
    skip_flags = []
    for l in range(num_layers - 1):
        w, b = params[l]
        d_out = w.shape[0]
        d_out_pad = _round_up(d_out, _LANE)
        b_pad = jnp.zeros((1, d_out_pad), b.dtype).at[0, :d_out].set(b)
        if l in skip_layer:
            d_x = w.shape[1] - d_in            # columns that multiply x
            w_x = w[:, :d_x].T                 # [d_x, Dout]
            w_in = w[:, d_x:].T                # [d_in, Dout]
            flat.append(_pad2(w_x, _round_up(d_x, _LANE), d_out_pad))
            flat.append(_pad2(w_in, _round_up(d_in, _LANE), d_out_pad))
            flat.append(b_pad)
            skip_flags.append(True)
        else:
            w_t = w.T                          # [Din, Dout]
            flat.append(_pad2(w_t, _round_up(w_t.shape[0], _LANE), d_out_pad))
            flat.append(b_pad)
            skip_flags.append(False)
    return flat, tuple(skip_flags)


def _layer_param_slices(flat_params, skip_flags):
    """Per-layer (is_skip, params_tuple, dout_pad) view of the flat list."""
    layers = []
    p = 0
    for is_skip in skip_flags:
        n = 3 if is_skip else 2
        ps = tuple(flat_params[p:p + n])
        layers.append((bool(is_skip), ps, ps[0].shape[1]))
        p += n
    return layers


# ----------------------------------------------------------------------------
# pallas_call builder for one fused chunk
# ----------------------------------------------------------------------------
_SINGLE_BUFFER_WEIGHTS = {"ok": hasattr(pl, "Buffered")}


def _make_in_specs(x_cols, inp_cols, param_shapes, tile_b, single_buffer):
    specs = [pl.BlockSpec((tile_b, x_cols), lambda i: (i, 0)),
             pl.BlockSpec((tile_b, inp_cols), lambda i: (i, 0))]
    for shp in param_shapes:
        if single_buffer:
            # Grid-invariant weights: one VMEM buffer is enough (halves
            # resident weight VMEM vs. default double-buffering).
            specs.append(pl.BlockSpec(shp, lambda i: (0, 0),
                                      pipeline_mode=pl.Buffered(1)))
        else:
            specs.append(pl.BlockSpec(shp, lambda i: (0, 0)))
    return specs


def _run_chunk(x_pad, inp_pad, chunk_params, chunk_flags, out_cols, out_dtype,
               tile_b, steps, negative_slope, activate_last, act_dtype,
               vmem_limit, flops, bytes_accessed):
    kernel = functools.partial(
        _mlp_chunk_kernel, skip_flags=chunk_flags,
        negative_slope=negative_slope, activate_last=activate_last,
        act_dtype=act_dtype)
    b_pad = x_pad.shape[0]
    out_shape = jax.ShapeDtypeStruct((b_pad, out_cols), out_dtype)
    out_spec = pl.BlockSpec((tile_b, out_cols), lambda i: (i, 0))
    cp = pltpu.CompilerParams(dimension_semantics=("parallel",),
                              vmem_limit_bytes=int(vmem_limit))
    ce = pl.CostEstimate(flops=int(flops), transcendentals=0,
                         bytes_accessed=int(bytes_accessed))
    param_shapes = [p.shape for p in chunk_params]

    def build(single_buffer):
        return pl.pallas_call(
            kernel,
            out_shape=out_shape,
            grid=(steps,),
            in_specs=_make_in_specs(x_pad.shape[1], inp_pad.shape[1],
                                    param_shapes, tile_b, single_buffer),
            out_specs=out_spec,
            compiler_params=cp,
            cost_estimate=ce)

    if _SINGLE_BUFFER_WEIGHTS["ok"]:
        try:
            return build(True)(x_pad, inp_pad, *chunk_params)
        except Exception:
            # Installed JAX rejects pipeline_mode / Buffered(1): demote once
            # and fall back to default (double) buffering for weights.
            _SINGLE_BUFFER_WEIGHTS["ok"] = False
    return build(False)(x_pad, inp_pad, *chunk_params)


# ----------------------------------------------------------------------------
# Forward wrapper
# ----------------------------------------------------------------------------
def skip_connection_forward_pallas(x, flat_params, skip_flags, d_out,
                                   *, negative_slope=0.01, max_tile_b=512):
    B, d_in = x.shape
    itemsize = jnp.dtype(x.dtype).itemsize
    d_in_pad = _round_up(d_in, _LANE)
    d_out_pad = _round_up(d_out, _LANE)

    layers = _layer_param_slices(flat_params, skip_flags)
    max_dim_pad = max([d_in_pad, d_out_pad]
                      + [p.shape[0] for (_, ps, _) in layers for p in ps]
                      + [p.shape[1] for (_, ps, _) in layers for p in ps])

    vmem_cap = _vmem_capacity_bytes()

    # ---- VMEM guard: all-resident weights vs. chunked fallback --------------
    weight_budget = int(0.45 * vmem_cap)
    chunks = [[]]
    cbytes = 0
    for layer in layers:
        lbytes = sum(int(p.size) * jnp.dtype(p.dtype).itemsize
                     for p in layer[1])
        if chunks[-1] and cbytes + lbytes > weight_budget:
            chunks.append([])
            cbytes = 0
        chunks[-1].append(layer)
        cbytes += lbytes
    max_chunk_weight_bytes = max(
        sum(int(p.size) * jnp.dtype(p.dtype).itemsize for l in ch for p in l[1])
        for ch in chunks)

    # ---- generation-aware batch tiling --------------------------------------
    # Per-row VMEM: double-buffered x/inp/out tiles + ~3 activation-sized
    # compiler scratch buffers (f32).
    per_row_bytes = (2 * (2 * max_dim_pad + d_in_pad) * itemsize
                     + 3 * max_dim_pad * 4)
    avail = int(0.8 * vmem_cap) - max_chunk_weight_bytes
    if avail > per_row_bytes * _SUBLANE:
        tile_cap = max(_SUBLANE,
                       (avail // per_row_bytes) // _SUBLANE * _SUBLANE)
    else:
        tile_cap = _SUBLANE
    tile_cap = min(max_tile_b, tile_cap)

    b8 = _round_up(B, _SUBLANE)
    steps = _cdiv(b8, tile_cap)
    if b8 >= 2 * _SUBLANE:
        steps = max(steps, 2)          # feed both v7x TensorCores
    tile_b = _round_up(_cdiv(B, steps), _SUBLANE)   # balanced, <= tile_cap
    b_pad = steps * tile_b

    inp_pad = jnp.zeros((b_pad, d_in_pad), x.dtype).at[:B, :d_in].set(x)

    # Inter-layer / inter-chunk activation dtype (bf16 only for bf16 weights).
    w_dtype = jnp.dtype(flat_params[0].dtype)
    act_dtype = jnp.bfloat16 if w_dtype == jnp.bfloat16 else jnp.float32

    cur = inp_pad
    for ci, chunk in enumerate(chunks):
        last_chunk = ci == len(chunks) - 1
        chunk_flags = tuple(l[0] for l in chunk)
        chunk_params = [p for l in chunk for p in l[1]]
        out_cols = chunk[-1][2]
        out_dtype = x.dtype if last_chunk else act_dtype
        chunk_w_bytes = sum(int(p.size) * jnp.dtype(p.dtype).itemsize
                            for p in chunk_params)

        # Cost estimate: 2*K*N MACs per row per layer (padded dims).
        kn = 0
        for is_skip, ps, dout in chunk:
            if is_skip:
                kn += (ps[0].shape[0] + ps[1].shape[0]) * dout
            else:
                kn += ps[0].shape[0] * dout
        flops = 2 * b_pad * kn
        bytes_accessed = (chunk_w_bytes
                          + b_pad * (cur.shape[1] + d_in_pad)
                          * jnp.dtype(cur.dtype).itemsize
                          + b_pad * out_cols * jnp.dtype(out_dtype).itemsize)

        # Explicit VMEM budget: single-buffered weights + double-buffered
        # x/inp/out tiles + ~3 activation-sized scratch, +20% headroom,
        # clamped to ~90% of physical VMEM (floor at 32 MiB).
        footprint = (chunk_w_bytes
                     + 2 * tile_b * (cur.shape[1] + d_in_pad)
                     * jnp.dtype(cur.dtype).itemsize
                     + 2 * tile_b * out_cols * jnp.dtype(out_dtype).itemsize
                     + 3 * tile_b * max_dim_pad * 4)
        vmem_limit = min(int(0.9 * vmem_cap),
                         max(32 << 20, int(1.2 * footprint)))

        cur = _run_chunk(cur, inp_pad, chunk_params, chunk_flags, out_cols,
                         out_dtype, tile_b, steps, negative_slope,
                         activate_last=not last_chunk, act_dtype=act_dtype,
                         vmem_limit=vmem_limit, flops=flops,
                         bytes_accessed=bytes_accessed)
    return cur[:B, :d_out]


# ----------------------------------------------------------------------------
# Parameter construction (deterministic, mirrors skip_connection.__init__)
# ----------------------------------------------------------------------------
def init_skip_connection_params(key, d_in, d_out, width, depth,
                                weight_norm=True, skip_layer=()):
    dims = [d_in] + [width] * depth + [d_out]
    num_layers = len(dims)
    params = []
    for l in range(num_layers - 1):
        in_dim = dims[l] + dims[0] if l in skip_layer else dims[l]
        out_dim = dims[l + 1]
        key, kv, kg, kb = jax.random.split(key, 4)
        if weight_norm:
            # effective weight = g * v / ||v|| (norm over input dim, per row)
            v = jax.random.normal(kv, (out_dim, in_dim), jnp.float32) * 0.1
            g = jax.random.uniform(kg, (out_dim, 1), jnp.float32,
                                   minval=0.5, maxval=1.5)
            norm = jnp.sqrt(jnp.sum(v * v, axis=1, keepdims=True) + 1e-12)
            w_eff = g * v / norm
            b = jax.random.normal(kb, (out_dim,), jnp.float32) * 0.05
        else:
            limit = jnp.sqrt(6.0 / (in_dim + out_dim))
            w_eff = jax.random.uniform(kv, (out_dim, in_dim), jnp.float32,
                                       minval=-limit, maxval=limit)
            b = jnp.zeros((out_dim,), jnp.float32)
        params.append((w_eff, b))   # PyTorch layout: [Dout, Din], [Dout]
    return params, num_layers


# ----------------------------------------------------------------------------
# Pure-JAX reference (matches skip_connection.forward)
# ----------------------------------------------------------------------------
def reference_forward(params, num_layers, skip_layer, x):
    inp = x
    for l in range(num_layers - 1):
        w, b = params[l]
        if l in skip_layer:
            x = jnp.concatenate([x, inp], axis=-1)
        x = jnp.dot(x, w.T, preferred_element_type=jnp.float32) + b
        if l < num_layers - 2:
            x = jnp.where(x > 0, x, 0.01 * x)
    return x


if __name__ == "__main__":
    key = jax.random.PRNGKey(0)
    # small, module-consistent shapes: x is [B, D]
    d_in, d_out, width, depth = 8, 4, 32, 3
    skip_layer = [2]
    B = 2

    key, kp, kx = jax.random.split(key, 3)
    params, num_layers = init_skip_connection_params(
        kp, d_in, d_out, width, depth, weight_norm=True, skip_layer=skip_layer)
    x = jax.random.normal(kx, (B, d_in), jnp.float32)

    flat_params, skip_flags = prepare_pallas_params(
        params, num_layers, skip_layer, d_in)

    out = skip_connection_forward_pallas(x, flat_params, skip_flags, d_out)
    out = jax.block_until_ready(out)

    ref = reference_forward(params, num_layers, skip_layer, x)
    assert out.shape == (B, d_out), out.shape
    assert jnp.allclose(out, ref, atol=1e-5, rtol=1e-5), (out, ref)

    print("KERNEL_OK")
</pallas_src>

<mosaic_0001>
module attributes {stable_mosaic.version = 11 : i64} {
  func.func @_mlp_chunk_kernel(%arg0: i32, %arg1: memref<8x128xf32, #tpu.memory_space<vmem>>, %arg2: memref<8x128xf32, #tpu.memory_space<vmem>>, %arg3: memref<128x128xf32, #tpu.memory_space<vmem>>, %arg4: memref<1x128xf32, #tpu.memory_space<vmem>>, %arg5: memref<128x128xf32, #tpu.memory_space<vmem>>, %arg6: memref<1x128xf32, #tpu.memory_space<vmem>>, %arg7: memref<128x128xf32, #tpu.memory_space<vmem>>, %arg8: memref<128x128xf32, #tpu.memory_space<vmem>>, %arg9: memref<1x128xf32, #tpu.memory_space<vmem>>, %arg10: memref<128x128xf32, #tpu.memory_space<vmem>>, %arg11: memref<1x128xf32, #tpu.memory_space<vmem>>, %arg12: memref<8x128xf32, #tpu.memory_space<vmem>>) attributes {dimension_semantics = [#tpu.dimension_semantics<parallel>], iteration_bounds = array<i64: 1>, scalar_prefetch = 0 : i64, scratch_operands = 0 : i64, tpu.core_type = #tpu.core_type<tc>, window_params = [{transform_indices = @transform_0, window_bounds = array<i64: 8, 128>}, {transform_indices = @transform_1, window_bounds = array<i64: 8, 128>}, {pipeline_mode = #tpu.pipeline_mode<synchronous>, transform_indices = @transform_2, window_bounds = array<i64: 128, 128>}, {pipeline_mode = #tpu.pipeline_mode<synchronous>, transform_indices = @transform_3, window_bounds = array<i64: 1, 128>}, {pipeline_mode = #tpu.pipeline_mode<synchronous>, transform_indices = @transform_4, window_bounds = array<i64: 128, 128>}, {pipeline_mode = #tpu.pipeline_mode<synchronous>, transform_indices = @transform_5, window_bounds = array<i64: 1, 128>}, {pipeline_mode = #tpu.pipeline_mode<synchronous>, transform_indices = @transform_6, window_bounds = array<i64: 128, 128>}, {pipeline_mode = #tpu.pipeline_mode<synchronous>, transform_indices = @transform_7, window_bounds = array<i64: 128, 128>}, {pipeline_mode = #tpu.pipeline_mode<synchronous>, transform_indices = @transform_8, window_bounds = array<i64: 1, 128>}, {pipeline_mode = #tpu.pipeline_mode<synchronous>, transform_indices = @transform_9, window_bounds = array<i64: 128, 128>}, {pipeline_mode = #tpu.pipeline_mode<synchronous>, transform_indices = @transform_10, window_bounds = array<i64: 1, 128>}, {transform_indices = @transform_11, window_bounds = array<i64: 8, 128>}]} {
    %c0 = arith.constant 0 : index
    %c0_0 = arith.constant 0 : index
    %0 = vector.load %arg3[%c0, %c0_0] : memref<128x128xf32, #tpu.memory_space<vmem>>, vector<128x128xf32>
    %c0_1 = arith.constant 0 : index
    %c0_2 = arith.constant 0 : index
    %1 = vector.load %arg4[%c0_1, %c0_2] : memref<1x128xf32, #tpu.memory_space<vmem>>, vector<1x128xf32>
    %c0_3 = arith.constant 0 : index
    %c0_4 = arith.constant 0 : index
    %2 = vector.load %arg1[%c0_3, %c0_4] : memref<8x128xf32, #tpu.memory_space<vmem>>, vector<8x128xf32>
    %cst = arith.constant dense<0.000000e+00> : vector<8x128xf32>
    %3 = tpu.matmul %2, %0, %cst {dimension_numbers = #tpu.dot_dimension_numbers<[1], [0], [0], [1], [0, 0, 1, 1], [], []>} : vector<8x128xf32>, vector<128x128xf32>, vector<8x128xf32> -> vector<8x128xf32>
    %4 = vector.broadcast %1 : vector<1x128xf32> to vector<8x128xf32>
    %5 = arith.addf %3, %4 : vector<8x128xf32>
    %cst_5 = arith.constant 0.00999999977 : f32
    %6 = vector.broadcast %cst_5 : f32 to vector<8x128xf32>
    %7 = arith.mulf %6, %5 : vector<8x128xf32>
    %8 = arith.maximumf %5, %7 : vector<8x128xf32>
    %c0_6 = arith.constant 0 : index
    %c0_7 = arith.constant 0 : index
    %9 = vector.load %arg5[%c0_6, %c0_7] : memref<128x128xf32, #tpu.memory_space<vmem>>, vector<128x128xf32>
    %c0_8 = arith.constant 0 : index
    %c0_9 = arith.constant 0 : index
    %10 = vector.load %arg6[%c0_8, %c0_9] : memref<1x128xf32, #tpu.memory_space<vmem>>, vector<1x128xf32>
    %cst_10 = arith.constant dense<0.000000e+00> : vector<8x128xf32>
    %11 = tpu.matmul %8, %9, %cst_10 {dimension_numbers = #tpu.dot_dimension_numbers<[1], [0], [0], [1], [0, 0, 1, 1], [], []>} : vector<8x128xf32>, vector<128x128xf32>, vector<8x128xf32> -> vector<8x128xf32>
    %12 = vector.broadcast %10 : vector<1x128xf32> to vector<8x128xf32>
    %13 = arith.addf %11, %12 : vector<8x128xf32>
    %cst_11 = arith.constant 0.00999999977 : f32
    %14 = vector.broadcast %cst_11 : f32 to vector<8x128xf32>
    %15 = arith.mulf %14, %13 : vector<8x128xf32>
    %16 = arith.maximumf %13, %15 : vector<8x128xf32>
    %c0_12 = arith.constant 0 : index
    %c0_13 = arith.constant 0 : index
    %17 = vector.load %arg7[%c0_12, %c0_13] : memref<128x128xf32, #tpu.memory_space<vmem>>, vector<128x128xf32>
    %c0_14 = arith.constant 0 : index
    %c0_15 = arith.constant 0 : index
    %18 = vector.load %arg8[%c0_14, %c0_15] : memref<128x128xf32, #tpu.memory_space<vmem>>, vector<128x128xf32>
    %c0_16 = arith.constant 0 : index
    %c0_17 = arith.constant 0 : index
    %19 = vector.load %arg9[%c0_16, %c0_17] : memref<1x128xf32, #tpu.memory_space<vmem>>, vector<1x128xf32>
    %cst_18 = arith.constant dense<0.000000e+00> : vector<8x128xf32>
    %20 = tpu.matmul %16, %17, %cst_18 {dimension_numbers = #tpu.dot_dimension_numbers<[1], [0], [0], [1], [0, 0, 1, 1], [], []>} : vector<8x128xf32>, vector<128x128xf32>, vector<8x128xf32> -> vector<8x128xf32>
    %c0_19 = arith.constant 0 : index
    %c0_20 = arith.constant 0 : index
    %21 = vector.load %arg2[%c0_19, %c0_20] : memref<8x128xf32, #tpu.memory_space<vmem>>, vector<8x128xf32>
    %cst_21 = arith.constant dense<0.000000e+00> : vector<8x128xf32>
    %22 = tpu.matmul %21, %18, %cst_21 {dimension_numbers = #tpu.dot_dimension_numbers<[1], [0], [0], [1], [0, 0, 1, 1], [], []>} : vector<8x128xf32>, vector<128x128xf32>, vector<8x128xf32> -> vector<8x128xf32>
    %23 = arith.addf %20, %22 : vector<8x128xf32>
    %24 = vector.broadcast %19 : vector<1x128xf32> to vector<8x128xf32>
    %25 = arith.addf %23, %24 : vector<8x128xf32>
    %cst_22 = arith.constant 0.00999999977 : f32
    %26 = vector.broadcast %cst_22 : f32 to vector<8x128xf32>
    %27 = arith.mulf %26, %25 : vector<8x128xf32>
    %28 = arith.maximumf %25, %27 : vector<8x128xf32>
    %c0_23 = arith.constant 0 : index
    %c0_24 = arith.constant 0 : index
    %29 = vector.load %arg10[%c0_23, %c0_24] : memref<128x128xf32, #tpu.memory_space<vmem>>, vector<128x128xf32>
    %c0_25 = arith.constant 0 : index
    %c0_26 = arith.constant 0 : index
    %30 = vector.load %arg11[%c0_25, %c0_26] : memref<1x128xf32, #tpu.memory_space<vmem>>, vector<1x128xf32>
    %cst_27 = arith.constant dense<0.000000e+00> : vector<8x128xf32>
    %31 = tpu.matmul %28, %29, %cst_27 {dimension_numbers = #tpu.dot_dimension_numbers<[1], [0], [0], [1], [0, 0, 1, 1], [], []>} : vector<8x128xf32>, vector<128x128xf32>, vector<8x128xf32> -> vector<8x128xf32>
    %32 = vector.broadcast %30 : vector<1x128xf32> to vector<8x128xf32>
    %33 = arith.addf %31, %32 : vector<8x128xf32>
    %c0_28 = arith.constant 0 : index
    %c0_29 = arith.constant 0 : index
    %34 = vector.load %arg12[%c0_28, %c0_29] : memref<8x128xf32, #tpu.memory_space<vmem>>, vector<8x128xf32>
    tpu.vector_store %arg12[%c0_28, %c0_29], %33 {strides = array<i32>} : memref<8x128xf32, #tpu.memory_space<vmem>>, vector<8x128xf32>,
    return
  }
  func.func @transform_0(%arg0: i32) -> (i32, i32) {
    %c0_i32 = arith.constant 0 : i32
    %c0_i32_0 = arith.constant 0 : i32
    return %arg0, %c0_i32 : i32, i32
  }
  func.func @transform_1(%arg0: i32) -> (i32, i32) {
    %c0_i32 = arith.constant 0 : i32
    %c0_i32_0 = arith.constant 0 : i32
    return %arg0, %c0_i32 : i32, i32
  }
  func.func @transform_2(%arg0: i32) -> (i32, i32) {
    %c0_i32 = arith.constant 0 : i32
    %c0_i32_0 = arith.constant 0 : i32
    %c0_i32_1 = arith.constant 0 : i32
    return %c0_i32, %c0_i32_0 : i32, i32
  }
  func.func @transform_3(%arg0: i32) -> (i32, i32) {
    %c0_i32 = arith.constant 0 : i32
    %c0_i32_0 = arith.constant 0 : i32
    %c0_i32_1 = arith.constant 0 : i32
    return %c0_i32, %c0_i32_0 : i32, i32
  }
  func.func @transform_4(%arg0: i32) -> (i32, i32) {
    %c0_i32 = arith.constant 0 : i32
    %c0_i32_0 = arith.constant 0 : i32
    %c0_i32_1 = arith.constant 0 : i32
    return %c0_i32, %c0_i32_0 : i32, i32
  }
  func.func @transform_5(%arg0: i32) -> (i32, i32) {
    %c0_i32 = arith.constant 0 : i32
    %c0_i32_0 = arith.constant 0 : i32
    %c0_i32_1 = arith.constant 0 : i32
    return %c0_i32, %c0_i32_0 : i32, i32
  }
  func.func @transform_6(%arg0: i32) -> (i32, i32) {
    %c0_i32 = arith.constant 0 : i32
    %c0_i32_0 = arith.constant 0 : i32
    %c0_i32_1 = arith.constant 0 : i32
    return %c0_i32, %c0_i32_0 : i32, i32
  }
  func.func @transform_7(%arg0: i32) -> (i32, i32) {
    %c0_i32 = arith.constant 0 : i32
    %c0_i32_0 = arith.constant 0 : i32
    %c0_i32_1 = arith.constant 0 : i32
    return %c0_i32, %c0_i32_0 : i32, i32
  }
  func.func @transform_8(%arg0: i32) -> (i32, i32) {
    %c0_i32 = arith.constant 0 : i32
    %c0_i32_0 = arith.constant 0 : i32
    %c0_i32_1 = arith.constant 0 : i32
    return %c0_i32, %c0_i32_0 : i32, i32
  }
  func.func @transform_9(%arg0: i32) -> (i32, i32) {
    %c0_i32 = arith.constant 0 : i32
    %c0_i32_0 = arith.constant 0 : i32
    %c0_i32_1 = arith.constant 0 : i32
    return %c0_i32, %c0_i32_0 : i32, i32
  }
  func.func @transform_10(%arg0: i32) -> (i32, i32) {
    %c0_i32 = arith.constant 0 : i32
    %c0_i32_0 = arith.constant 0 : i32
    %c0_i32_1 = arith.constant 0 : i32
    return %c0_i32, %c0_i32_0 : i32, i32
  }
  func.func @transform_11(%arg0: i32) -> (i32, i32) {
    %c0_i32 = arith.constant 0 : i32
    %c0_i32_0 = arith.constant 0 : i32
    return %arg0, %c0_i32 : i32, i32
  }
}

module attributes {stable_mosaic.version = 11 : i64} {
  func.func @_mlp_chunk_kernel(%arg0: i32, %arg1: memref<8x128xf32, #tpu.memory_space<vmem>>, %arg2: memref<8x128xf32, #tpu.memory_space<vmem>>, %arg3: memref<128x128xf32, #tpu.memory_space<vmem>>, %arg4: memref<1x128xf32, #tpu.memory_space<vmem>>, %arg5: memref<128x128xf32, #tpu.memory_space<vmem>>, %arg6: memref<1x128xf32, #tpu.memory_space<vmem>>, %arg7: memref<128x128xf32, #tpu.memory_space<vmem>>, %arg8: memref<128x128xf32, #tpu.memory_space<vmem>>, %arg9: memref<1x128xf32, #tpu.memory_space<vmem>>, %arg10: memref<128x128xf32, #tpu.memory_space<vmem>>, %arg11: memref<1x128xf32, #tpu.memory_space<vmem>>, %arg12: memref<8x128xf32, #tpu.memory_space<vmem>>) attributes {dimension_semantics = [#tpu.dimension_semantics<parallel>], iteration_bounds = array<i64: 1>, scalar_prefetch = 0 : i64, scratch_operands = 0 : i64, tpu.core_type = #tpu.core_type<tc>, window_params = [{transform_indices = @transform_0, window_bounds = array<i64: 8, 128>}, {transform_indices = @transform_1, window_bounds = array<i64: 8, 128>}, {pipeline_mode = #tpu.pipeline_mode<synchronous>, transform_indices = @transform_2, window_bounds = array<i64: 128, 128>}, {pipeline_mode = #tpu.pipeline_mode<synchronous>, transform_indices = @transform_3, window_bounds = array<i64: 1, 128>}, {pipeline_mode = #tpu.pipeline_mode<synchronous>, transform_indices = @transform_4, window_bounds = array<i64: 128, 128>}, {pipeline_mode = #tpu.pipeline_mode<synchronous>, transform_indices = @transform_5, window_bounds = array<i64: 1, 128>}, {pipeline_mode = #tpu.pipeline_mode<synchronous>, transform_indices = @transform_6, window_bounds = array<i64: 128, 128>}, {pipeline_mode = #tpu.pipeline_mode<synchronous>, transform_indices = @transform_7, window_bounds = array<i64: 128, 128>}, {pipeline_mode = #tpu.pipeline_mode<synchronous>, transform_indices = @transform_8, window_bounds = array<i64: 1, 128>}, {pipeline_mode = #tpu.pipeline_mode<synchronous>, transform_indices = @transform_9, window_bounds = array<i64: 128, 128>}, {pipeline_mode = #tpu.pipeline_mode<synchronous>, transform_indices = @transform_10, window_bounds = array<i64: 1, 128>}, {transform_indices = @transform_11, window_bounds = array<i64: 8, 128>}]} {
    %c0 = arith.constant 0 : index
    %c0_0 = arith.constant 0 : index
    %0 = vector.load %arg3[%c0, %c0_0] : memref<128x128xf32, #tpu.memory_space<vmem>>, vector<128x128xf32>
    %c0_1 = arith.constant 0 : index
    %c0_2 = arith.constant 0 : index
    %1 = vector.load %arg4[%c0_1, %c0_2] : memref<1x128xf32, #tpu.memory_space<vmem>>, vector<1x128xf32>
    %c0_3 = arith.constant 0 : index
    %c0_4 = arith.constant 0 : index
    %2 = vector.load %arg1[%c0_3, %c0_4] : memref<8x128xf32, #tpu.memory_space<vmem>>, vector<8x128xf32>
    %cst = arith.constant dense<0.000000e+00> : vector<8x128xf32>
    %3 = tpu.matmul %2, %0, %cst {dimension_numbers = #tpu.dot_dimension_numbers<[1], [0], [0], [1], [0, 0, 1, 1], [], []>} : vector<8x128xf32>, vector<128x128xf32>, vector<8x128xf32> -> vector<8x128xf32>
    %4 = vector.broadcast %1 : vector<1x128xf32> to vector<8x128xf32>
    %5 = arith.addf %3, %4 : vector<8x128xf32>
    %cst_5 = arith.constant 0.00999999977 : f32
    %6 = vector.broadcast %cst_5 : f32 to vector<8x128xf32>
    %7 = arith.mulf %6, %5 : vector<8x128xf32>
    %8 = arith.maximumf %5, %7 : vector<8x128xf32>
    %c0_6 = arith.constant 0 : index
    %c0_7 = arith.constant 0 : index
    %9 = vector.load %arg5[%c0_6, %c0_7] : memref<128x128xf32, #tpu.memory_space<vmem>>, vector<128x128xf32>
    %c0_8 = arith.constant 0 : index
    %c0_9 = arith.constant 0 : index
    %10 = vector.load %arg6[%c0_8, %c0_9] : memref<1x128xf32, #tpu.memory_space<vmem>>, vector<1x128xf32>
    %cst_10 = arith.constant dense<0.000000e+00> : vector<8x128xf32>
    %11 = tpu.matmul %8, %9, %cst_10 {dimension_numbers = #tpu.dot_dimension_numbers<[1], [0], [0], [1], [0, 0, 1, 1], [], []>} : vector<8x128xf32>, vector<128x128xf32>, vector<8x128xf32> -> vector<8x128xf32>
    %12 = vector.broadcast %10 : vector<1x128xf32> to vector<8x128xf32>
    %13 = arith.addf %11, %12 : vector<8x128xf32>
    %cst_11 = arith.constant 0.00999999977 : f32
    %14 = vector.broadcast %cst_11 : f32 to vector<8x128xf32>
    %15 = arith.mulf %14, %13 : vector<8x128xf32>
    %16 = arith.maximumf %13, %15 : vector<8x128xf32>
    %c0_12 = arith.constant 0 : index
    %c0_13 = arith.constant 0 : index
    %17 = vector.load %arg7[%c0_12, %c0_13] : memref<128x128xf32, #tpu.memory_space<vmem>>, vector<128x128xf32>
    %c0_14 = arith.constant 0 : index
    %c0_15 = arith.constant 0 : index
    %18 = vector.load %arg8[%c0_14, %c0_15] : memref<128x128xf32, #tpu.memory_space<vmem>>, vector<128x128xf32>
    %c0_16 = arith.constant 0 : index
    %c0_17 = arith.constant 0 : index
    %19 = vector.load %arg9[%c0_16, %c0_17] : memref<1x128xf32, #tpu.memory_space<vmem>>, vector<1x128xf32>
    %cst_18 = arith.constant dense<0.000000e+00> : vector<8x128xf32>
    %20 = tpu.matmul %16, %17, %cst_18 {dimension_numbers = #tpu.dot_dimension_numbers<[1], [0], [0], [1], [0, 0, 1, 1], [], []>} : vector<8x128xf32>, vector<128x128xf32>, vector<8x128xf32> -> vector<8x128xf32>
    %c0_19 = arith.constant 0 : index
    %c0_20 = arith.constant 0 : index
    %21 = vector.load %arg2[%c0_19, %c0_20] : memref<8x128xf32, #tpu.memory_space<vmem>>, vector<8x128xf32>
    %cst_21 = arith.constant dense<0.000000e+00> : vector<8x128xf32>
    %22 = tpu.matmul %21, %18, %cst_21 {dimension_numbers = #tpu.dot_dimension_numbers<[1], [0], [0], [1], [0, 0, 1, 1], [], []>} : vector<8x128xf32>, vector<128x128xf32>, vector<8x128xf32> -> vector<8x128xf32>
    %23 = arith.addf %20, %22 : vector<8x128xf32>
    %24 = vector.broadcast %19 : vector<1x128xf32> to vector<8x128xf32>
    %25 = arith.addf %23, %24 : vector<8x128xf32>
    %cst_22 = arith.constant 0.00999999977 : f32
    %26 = vector.broadcast %cst_22 : f32 to vector<8x128xf32>
    %27 = arith.mulf %26, %25 : vector<8x128xf32>
    %28 = arith.maximumf %25, %27 : vector<8x128xf32>
    %c0_23 = arith.constant 0 : index
    %c0_24 = arith.constant 0 : index
    %29 = vector.load %arg10[%c0_23, %c0_24] : memref<128x128xf32, #tpu.memory_space<vmem>>, vector<128x128xf32>
    %c0_25 = arith.constant 0 : index
    %c0_26 = arith.constant 0 : index
    %30 = vector.load %arg11[%c0_25, %c0_26] : memref<1x128xf32, #tpu.memory_space<vmem>>, vector<1x128xf32>
    %cst_27 = arith.constant dense<0.000000e+00> : vector<8x128xf32>
    %31 = tpu.matmul %28, %29, %cst_27 {dimension_numbers = #tpu.dot_dimension_numbers<[1], [0], [0], [1], [0, 0, 1, 1], [], []>} : vector<8x128xf32>, vector<128x128xf32>, vector<8x128xf32> -> vector<8x128xf32>
    %32 = vector.broadcast %30 : vector<1x128xf32> to vector<8x128xf32>
    %33 = arith.addf %31, %32 : vector<8x128xf32>
    %c0_28 = arith.constant 0 : index
    %c0_29 = arith.constant 0 : index
    %34 = vector.load %arg12[%c0_28, %c0_29] : memref<8x128xf32, #tpu.memory_space<vmem>>, vector<8x128xf32>
    tpu.vector_store %arg12[%c0_28, %c0_29], %33 {strides = array<i32>} : memref<8x128xf32, #tpu.memory_space<vmem>>, vector<8x128xf32>,
    return
  }
  func.func @transform_0(%arg0: i32) -> (i32, i32) {
    %c0_i32 = arith.constant 0 : i32
    %c0_i32_0 = arith.constant 0 : i32
    return %arg0, %c0_i32 : i32, i32
  }
  func.func @transform_1(%arg0: i32) -> (i32, i32) {
    %c0_i32 = arith.constant 0 : i32
    %c0_i32_0 = arith.constant 0 : i32
    return %arg0, %c0_i32 : i32, i32
  }
  func.func @transform_2(%arg0: i32) -> (i32, i32) {
    %c0_i32 = arith.constant 0 : i32
    %c0_i32_0 = arith.constant 0 : i32
    %c0_i32_1 = arith.constant 0 : i32
    return %c0_i32, %c0_i32_0 : i32, i32
  }
  func.func @transform_3(%arg0: i32) -> (i32, i32) {
    %c0_i32 = arith.constant 0 : i32
    %c0_i32_0 = arith.constant 0 : i32
    %c0_i32_1 = arith.constant 0 : i32
    return %c0_i32, %c0_i32_0 : i32, i32
  }
  func.func @transform_4(%arg0: i32) -> (i32, i32) {
    %c0_i32 = arith.constant 0 : i32
    %c0_i32_0 = arith.constant 0 : i32
    %c0_i32_1 = arith.constant 0 : i32
    return %c0_i32, %c0_i32_0 : i32, i32
  }
  func.func @transform_5(%arg0: i32) -> (i32, i32) {
    %c0_i32 = arith.constant 0 : i32
    %c0_i32_0 = arith.constant 0 : i32
    %c0_i32_1 = arith.constant 0 : i32
    return %c0_i32, %c0_i32_0 : i32, i32
  }
  func.func @transform_6(%arg0: i32) -> (i32, i32) {
    %c0_i32 = arith.constant 0 : i32
    %c0_i32_0 = arith.constant 0 : i32
    %c0_i32_1 = arith.constant 0 : i32
    return %c0_i32, %c0_i32_0 : i32, i32
  }
  func.func @transform_7(%arg0: i32) -> (i32, i32) {
    %c0_i32 = arith.constant 0 : i32
    %c0_i32_0 = arith.constant 0 : i32
    %c0_i32_1 = arith.constant 0 : i32
    return %c0_i32, %c0_i32_0 : i32, i32
  }
  func.func @transform_8(%arg0: i32) -> (i32, i32) {
    %c0_i32 = arith.constant 0 : i32
    %c0_i32_0 = arith.constant 0 : i32
    %c0_i32_1 = arith.constant 0 : i32
    return %c0_i32, %c0_i32_0 : i32, i32
  }
  func.func @transform_9(%arg0: i32) -> (i32, i32) {
    %c0_i32 = arith.constant 0 : i32
    %c0_i32_0 = arith.constant 0 : i32
    %c0_i32_1 = arith.constant 0 : i32
    return %c0_i32, %c0_i32_0 : i32, i32
  }
  func.func @transform_10(%arg0: i32) -> (i32, i32) {
    %c0_i32 = arith.constant 0 : i32
    %c0_i32_0 = arith.constant 0 : i32
    %c0_i32_1 = arith.constant 0 : i32
    return %c0_i32, %c0_i32_0 : i32, i32
  }
  func.func @transform_11(%arg0: i32) -> (i32, i32) {
    %c0_i32 = arith.constant 0 : i32
    %c0_i32_0 = arith.constant 0 : i32
    return %arg0, %c0_i32 : i32, i32
  }
}

</mosaic_0001>

<llo_original>
// kernel: tpu_custom_call.1
$region0: #{tpu_custom_call.1}
  #allocation0 [shape = 'u32[]', space=smem, size = 0x4, offset = 0x4, fixed_abs, tag = 'smem constant byte address 0x4 - core index']
  #allocation1 [shape = 'u32[144,128]{1,0:T(1,128)}', space=vmem, size = 0x12000, scoped, tag = 'internal scratch']
  %s0 = inlined_call_operand.hbm [shape: f32[8,128], index: 0, kind: input, shape index: {}]
  %s1 = inlined_call_operand.hbm [shape: f32[8,128], index: 1, kind: input, shape index: {}]
  %s2 = inlined_call_operand.hbm [shape: f32[128,128], index: 2, kind: input, shape index: {}]
  %s3 = inlined_call_operand.vmem [shape: f32[1,128], index: 3, kind: input, shape index: {}]
  %s4 = inlined_call_operand.hbm [shape: f32[128,128], index: 4, kind: input, shape index: {}]
  %s5 = inlined_call_operand.vmem [shape: f32[1,128], index: 5, kind: input, shape index: {}]
  %s6 = inlined_call_operand.hbm [shape: f32[128,128], index: 6, kind: input, shape index: {}]
  %s7 = inlined_call_operand.hbm [shape: f32[128,128], index: 7, kind: input, shape index: {}]
  %s8 = inlined_call_operand.vmem [shape: f32[1,128], index: 8, kind: input, shape index: {}]
  %s9 = inlined_call_operand.hbm [shape: f32[128,128], index: 9, kind: input, shape index: {}]
  %s10 = inlined_call_operand.vmem [shape: f32[1,128], index: 10, kind: input, shape index: {}]
  %s11 = inlined_call_operand.hbm [shape: f32[8,128], index: 11, kind: output, shape index: {}]
  %s12 = sld [smem:[#allocation0]]
  $region82: #{tpu_custom_call.1} parent=0
    _
  %s14 = ssub.s32 1, %s12
  %s15 = scalar_select 0, %s14, %s12
  $region1: #{tpu_custom_call.1} parent=0
    #allocation2 [shape = 'u8[4096]{0}', space=vmem, size = 0x1000, scoped, tag = 'input window, operand 0, single buffered']
    #allocation3 [shape = 's32[1]{0}', space=sflag, size = 0x4, scoped, tag = 'scoped memory for tpu_custom_call.1']
    #allocation4 [shape = 's32[1]{0}', space=sflag, size = 0x4, scoped, tag = 'scoped memory for tpu_custom_call.1']
    #allocation5 [shape = 'u8[4096]{0}', space=vmem, size = 0x1000, scoped, tag = 'input window, operand 1, single buffered']
    #allocation6 [shape = 's32[1]{0}', space=sflag, size = 0x4, scoped, tag = 'scoped memory for tpu_custom_call.1']
    #allocation7 [shape = 'u8[65536]{0}', space=vmem, size = 0x10000, scoped, tag = 'input window, operand 2, single buffered']
    #allocation8 [shape = 'u8[65536]{0}', space=vmem, size = 0x10000, scoped, tag = 'input window, operand 4, single buffered']
    #allocation9 [shape = 's32[1]{0}', space=sflag, size = 0x4, scoped, tag = 'scoped memory for tpu_custom_call.1']
    #allocation10 [shape = 'u8[65536]{0}', space=vmem, size = 0x10000, scoped, tag = 'input window, operand 6, single buffered']
    #allocation11 [shape = 'u8[65536]{0}', space=vmem, size = 0x10000, scoped, tag = 'input window, operand 7, single buffered']
    #allocation12 [shape = 's32[1]{0}', space=sflag, size = 0x4, scoped, tag = 'scoped memory for tpu_custom_call.1']
    #allocation13 [shape = 'u8[65536]{0}', space=vmem, size = 0x10000, scoped, tag = 'input window, operand 9, single buffered']
    #allocation14 [shape = 'u8[4096]{0}', space=vmem, size = 0x1000, scoped, tag = 'output window, operand 0, single buffered']
    %16 = vsyncpa [#allocation3], 0
    %17 = vsyncpa [#allocation6], 0
    %18 = vsyncpa [#allocation9], 0
    %19 = vsyncpa [#allocation12], 0
    %20 = vsyncpa [#allocation4], 0
    // Predicated region
    $region2: #{tpu_custom_call.1} parent=1 // pred_check
      _
    $region3: #{tpu_custom_call.1} parent=1 // pred_check_branch
      %22 = sbr.rel (0) target = $region5
    $region4: #{tpu_custom_call.1} parent=1 // pred_region
      %s24 = ssub.s32 128, 128
      %25 = vsyncadd [#allocation3], %s24
      %s27 = sshll.u32 [#allocation2], 4
      %s28 = int_to_ptr.vmem [resolvable:$true] %s27
      %30 = dma.hbm_to_vmem [thread:$0]  %s0, 128, %s28, [#allocation3]
    $region5: #{tpu_custom_call.1} parent=1 // pred_fallthru
      _
    // Predicated region
    $region6: #{tpu_custom_call.1} parent=1 // pred_check
      _
    $region7: #{tpu_custom_call.1} parent=1 // pred_check_branch
      %32 = sbr.rel (0) target = $region9
    $region8: #{tpu_custom_call.1} parent=1 // pred_region
      %s34 = ssub.s32 128, 128
      %35 = vsyncadd [#allocation6], %s34
      %s37 = sshll.u32 [#allocation5], 4
      %s38 = int_to_ptr.vmem [resolvable:$true] %s37
      %40 = dma.hbm_to_vmem [thread:$0]  %s1, 128, %s38, [#allocation6]
    $region9: #{tpu_custom_call.1} parent=1 // pred_fallthru
      _
    // Predicated region
    $region10: #{tpu_custom_call.1} parent=1 // pred_check
      _
    $region11: #{tpu_custom_call.1} parent=1 // pred_check_branch
      %42 = sbr.rel (0) target = $region13
    $region12: #{tpu_custom_call.1} parent=1 // pred_region
      %s44 = ssub.s32 2048, 2048
      %45 = vsyncadd [#allocation6], %s44
      %s46 = sshll.u32 [#allocation7], 4
      %s47 = int_to_ptr.vmem [resolvable:$true] %s46
      %52 = dma.hbm_to_vmem [thread:$0]  %s2, 2048, %s47, [#allocation6], 128, 128, 8
    $region13: #{tpu_custom_call.1} parent=1 // pred_fallthru
      _
    // Predicated region
    $region14: #{tpu_custom_call.1} parent=1 // pred_check
      _
    $region15: #{tpu_custom_call.1} parent=1 // pred_check_branch
      %54 = sbr.rel (0) target = $region17
    $region16: #{tpu_custom_call.1} parent=1 // pred_region
      _
    $region17: #{tpu_custom_call.1} parent=1 // pred_fallthru
      _
    // Predicated region
    $region18: #{tpu_custom_call.1} parent=1 // pred_check
      _
    $region19: #{tpu_custom_call.1} parent=1 // pred_check_branch
      %56 = sbr.rel (0) target = $region21
    $region20: #{tpu_custom_call.1} parent=1 // pred_region
      %s58 = ssub.s32 2048, 2048
      %59 = vsyncadd [#allocation9], %s58
      %s60 = sshll.u32 [#allocation8], 4
      %s61 = int_to_ptr.vmem [resolvable:$true] %s60
      %66 = dma.hbm_to_vmem [thread:$0]  %s4, 2048, %s61, [#allocation9], 128, 128, 8
    $region21: #{tpu_custom_call.1} parent=1 // pred_fallthru
      _
    // Predicated region
    $region22: #{tpu_custom_call.1} parent=1 // pred_check
      _
    $region23: #{tpu_custom_call.1} parent=1 // pred_check_branch
      %68 = sbr.rel (0) target = $region25
    $region24: #{tpu_custom_call.1} parent=1 // pred_region
      _
    $region25: #{tpu_custom_call.1} parent=1 // pred_fallthru
      _
    // Predicated region
    $region26: #{tpu_custom_call.1} parent=1 // pred_check
      _
    $region27: #{tpu_custom_call.1} parent=1 // pred_check_branch
      %70 = sbr.rel (0) target = $region29
    $region28: #{tpu_custom_call.1} parent=1 // pred_region
      %s72 = ssub.s32 2048, 2048
      %73 = vsyncadd [#allocation9], %s72
      %s74 = sshll.u32 [#allocation10], 4
      %s75 = int_to_ptr.vmem [resolvable:$true] %s74
      %80 = dma.hbm_to_vmem [thread:$0]  %s6, 2048, %s75, [#allocation9], 128, 128, 8
    $region29: #{tpu_custom_call.1} parent=1 // pred_fallthru
      _
    // Predicated region
    $region30: #{tpu_custom_call.1} parent=1 // pred_check
      _
    $region31: #{tpu_custom_call.1} parent=1 // pred_check_branch
      %82 = sbr.rel (0) target = $region33
    $region32: #{tpu_custom_call.1} parent=1 // pred_region
      %s84 = ssub.s32 2048, 2048
      %85 = vsyncadd [#allocation12], %s84
      %s86 = sshll.u32 [#allocation11], 4
      %s87 = int_to_ptr.vmem [resolvable:$true] %s86
      %92 = dma.hbm_to_vmem [thread:$0]  %s7, 2048, %s87, [#allocation12], 128, 128, 8
    $region33: #{tpu_custom_call.1} parent=1 // pred_fallthru
      _
    // Predicated region
    $region34: #{tpu_custom_call.1} parent=1 // pred_check
      _
    $region35: #{tpu_custom_call.1} parent=1 // pred_check_branch
      %94 = sbr.rel (0) target = $region37
    $region36: #{tpu_custom_call.1} parent=1 // pred_region
      _
    $region37: #{tpu_custom_call.1} parent=1 // pred_fallthru
      _
    // Predicated region
    $region38: #{tpu_custom_call.1} parent=1 // pred_check
      _
    $region39: #{tpu_custom_call.1} parent=1 // pred_check_branch
      %96 = sbr.rel (0) target = $region41
    $region40: #{tpu_custom_call.1} parent=1 // pred_region
      %s98 = ssub.s32 2048, 2048
      %99 = vsyncadd [#allocation12], %s98
      %s100 = sshll.u32 [#allocation13], 4
      %s101 = int_to_ptr.vmem [resolvable:$true] %s100
      %106 = dma.hbm_to_vmem [thread:$0]  %s9, 2048, %s101, [#allocation12], 128, 128, 8
    $region41: #{tpu_custom_call.1} parent=1 // pred_fallthru
      _
    // Predicated region
    $region42: #{tpu_custom_call.1} parent=1 // pred_check
      _
    $region43: #{tpu_custom_call.1} parent=1 // pred_check_branch
      %108 = sbr.rel (0) target = $region45
    $region44: #{tpu_custom_call.1} parent=1 // pred_region
      _
    $region45: #{tpu_custom_call.1} parent=1 // pred_fallthru
      _
    // Predicated region
    $region46: #{tpu_custom_call.1} parent=1 // pred_check
      _
    $region47: #{tpu_custom_call.1} parent=1 // pred_check_branch
      %110 = sbr.rel (0) target = $region49
    $region48: #{tpu_custom_call.1} parent=1 // pred_region
      %111 = dma.done [#allocation3], 128
    $region49: #{tpu_custom_call.1} parent=1 // pred_fallthru
      _
    // Predicated region
    $region50: #{tpu_custom_call.1} parent=1 // pred_check
      _
    $region51: #{tpu_custom_call.1} parent=1 // pred_check_branch
      %113 = sbr.rel (0) target = $region53
    $region52: #{tpu_custom_call.1} parent=1 // pred_region
      %114 = dma.done [#allocation6], 128
    $region53: #{tpu_custom_call.1} parent=1 // pred_fallthru
      _
    // Predicated region
    $region54: #{tpu_custom_call.1} parent=1 // pred_check
      _
    $region55: #{tpu_custom_call.1} parent=1 // pred_check_branch
      %116 = sbr.rel (0) target = $region57
    $region56: #{tpu_custom_call.1} parent=1 // pred_region
      %117 = dma.done [#allocation6], 2048
    $region57: #{tpu_custom_call.1} parent=1 // pred_fallthru
      _
    // Predicated region
    $region58: #{tpu_custom_call.1} parent=1 // pred_check
      _
    $region59: #{tpu_custom_call.1} parent=1 // pred_check_branch
      %119 = sbr.rel (0) target = $region61
    $region60: #{tpu_custom_call.1} parent=1 // pred_region
      %120 = dma.done [#allocation9], 2048
    $region61: #{tpu_custom_call.1} parent=1 // pred_fallthru
      _
    // Predicated region
    $region62: #{tpu_custom_call.1} parent=1 // pred_check
      _
    $region63: #{tpu_custom_call.1} parent=1 // pred_check_branch
      %122 = sbr.rel (0) target = $region65
    $region64: #{tpu_custom_call.1} parent=1 // pred_region
      %123 = dma.done [#allocation9], 2048
    $region65: #{tpu_custom_call.1} parent=1 // pred_fallthru
      _
    // Predicated region
    $region66: #{tpu_custom_call.1} parent=1 // pred_check
      _
    $region67: #{tpu_custom_call.1} parent=1 // pred_check_branch
      %125 = sbr.rel (0) target = $region69
    $region68: #{tpu_custom_call.1} parent=1 // pred_region
      %126 = dma.done [#allocation12], 2048
    $region69: #{tpu_custom_call.1} parent=1 // pred_fallthru
      _
    // Predicated region
    $region70: #{tpu_custom_call.1} parent=1 // pred_check
      _
    $region71: #{tpu_custom_call.1} parent=1 // pred_check_branch
      %128 = sbr.rel (0) target = $region73
    $region72: #{tpu_custom_call.1} parent=1 // pred_region
      %129 = dma.done [#allocation12], 2048
    $region73: #{tpu_custom_call.1} parent=1 // pred_fallthru
      _
    %v130 = vld [vmem:[#allocation7] sm:$0xff]
    %v131 = vld [vmem:[#allocation7 + $0x8] sm:$0xff]
    %v132 = vld [vmem:[#allocation7 + $0x10] sm:$0xff]
    %v133 = vld [vmem:[#allocation7 + $0x18] sm:$0xff]
    %v134 = vld [vmem:[#allocation7 + $0x20] sm:$0xff]
    %v135 = vld [vmem:[#allocation7 + $0x28] sm:$0xff]
    %v136 = vld [vmem:[#allocation7 + $0x30] sm:$0xff]
    %v137 = vld [vmem:[#allocation7 + $0x38] sm:$0xff]
    %v138 = vld [vmem:[#allocation7 + $0x40] sm:$0xff]
    %v139 = vld [vmem:[#allocation7 + $0x48] sm:$0xff]
    %v140 = vld [vmem:[#allocation7 + $0x50] sm:$0xff]
    %v141 = vld [vmem:[#allocation7 + $0x58] sm:$0xff]
    %v142 = vld [vmem:[#allocation7 + $0x60] sm:$0xff]
    %v143 = vld [vmem:[#allocation7 + $0x68] sm:$0xff]
    %v144 = vld [vmem:[#allocation7 + $0x70] sm:$0xff]
    %v145 = vld [vmem:[#allocation7 + $0x78] sm:$0xff]
    %v146 = vld [vmem:[%s3] sm:$0x1]
    %v147 = vld [vmem:[#allocation2] sm:$0xff]
    %v149 = vlaneseq
    %v150 = vshrl.u32 %v149, 7
    %v151 = vsub.s32 0, %v150
    %v152 = vrot.slane %v146, %v151
    %154 = vmatprep.subr.mxu0 0.0
    %155 = vmatpush1.msra.mxu0 %v130
    %156 = vmatprep.subr.mxu0 0.0
    %157 = vmatpush1.msra.mxu0 %v131
    %158 = vmatprep.subr.mxu0 0.0
    %159 = vmatpush1.msra.mxu0 %v132
    %160 = vmatprep.subr.mxu0 0.0
    %161 = vmatpush1.msra.mxu0 %v133
    %162 = vmatprep.subr.mxu0 0.0
    %163 = vmatpush1.msra.mxu0 %v134
    %164 = vmatprep.subr.mxu0 0.0
    %165 = vmatpush1.msra.mxu0 %v135
    %166 = vmatprep.subr.mxu0 0.0
    %167 = vmatpush1.msra.mxu0 %v136
    %168 = vmatprep.subr.mxu0 0.0
    %169 = vmatpush1.msra.mxu0 %v137
    %170 = vmatprep.subr.mxu0 0.0
    %171 = vmatpush1.msra.mxu0 %v138
    %172 = vmatprep.subr.mxu0 0.0
    %173 = vmatpush1.msra.mxu0 %v139
    %174 = vmatprep.subr.mxu0 0.0
    %175 = vmatpush1.msra.mxu0 %v140
    %176 = vmatprep.subr.mxu0 0.0
    %177 = vmatpush1.msra.mxu0 %v141
    %178 = vmatprep.subr.mxu0 0.0
    %179 = vmatpush1.msra.mxu0 %v142
    %180 = vmatprep.subr.mxu0 0.0
    %181 = vmatpush1.msra.mxu0 %v143
    %182 = vmatprep.subr.mxu0 0.0
    %183 = vmatpush1.msra.mxu0 %v144
    %184 = vmatprep.subr.mxu0 0.0
    %185 = vmatpush1.msra.mxu0 %v145
    %186 = vmatprep.subr.mxu0 0.0
    %187 = vmatpush1.msra.mxu0 0.0
    %188 = vmatprep.subr.mxu0 0.0
    %189 = vmatpush1.msra.mxu0 0.0
    %190 = vmatprep.subr.mxu0 0.0
    %191 = vmatpush1.msra.mxu0 0.0
    %192 = vmatprep.subr.mxu0 0.0
    %193 = vmatpush1.msra.mxu0 0.0
    %194 = vmatprep.subr.mxu0 0.0
    %195 = vmatpush1.msra.mxu0 0.0
    %196 = vmatprep.subr.mxu0 0.0
    %197 = vmatpush1.msra.mxu0 0.0
    %198 = vmatprep.subr.mxu0 0.0
    %199 = vmatpush1.msra.mxu0 0.0
    %200 = vmatprep.subr.mxu0 0.0
    %201 = vmatpush1.msra.mxu0 0.0
    %202 = vmatprep.subr.mxu0 0.0
    %203 = vmatpush1.msra.mxu0 0.0
    %204 = vmatprep.subr.mxu0 0.0
    %205 = vmatpush1.msra.mxu0 0.0
    %206 = vmatprep.subr.mxu0 0.0
    %207 = vmatpush1.msra.mxu0 0.0
    %208 = vmatprep.subr.mxu0 0.0
    %209 = vmatpush1.msra.mxu0 0.0
    %210 = vmatprep.subr.mxu0 0.0
    %211 = vmatpush1.msra.mxu0 0.0
    %212 = vmatprep.subr.mxu0 0.0
    %213 = vmatpush1.msra.mxu0 0.0
    %214 = vmatprep.subr.mxu0 0.0
    %215 = vmatpush1.msra.mxu0 0.0
    %216 = vmatprep.subr.mxu0 0.0
    %217 = vmatpush1.msra.mxu0 0.0
    %218 = vmatprep.mubr.f32.mxu0 0.0
    %219 = vmatmul.mubr.f32.gmra.mrb[0].mxu0 %v147
    %v220 = vpop.f32.mrb[0].mxu0
    %v221 = vadd.f32 %v152, %v220
    %v222 = vpop.f32.mrb[0].mxu0
    %223 = vdwg.mxu0
    %v224 = vmul.f32 %v221, 0.01
    %v225 = vmax.f32 %v221, %v224
    %v226 = vld [vmem:[#allocation8] sm:$0xff]
    %v227 = vld [vmem:[#allocation8 + $0x8] sm:$0xff]
    %v228 = vld [vmem:[#allocation8 + $0x10] sm:$0xff]
    %v229 = vld [vmem:[#allocation8 + $0x18] sm:$0xff]
    %v230 = vld [vmem:[#allocation8 + $0x20] sm:$0xff]
    %v231 = vld [vmem:[#allocation8 + $0x28] sm:$0xff]
    %v232 = vld [vmem:[#allocation8 + $0x30] sm:$0xff]
    %v233 = vld [vmem:[#allocation8 + $0x38] sm:$0xff]
    %v234 = vld [vmem:[#allocation8 + $0x40] sm:$0xff]
    %v235 = vld [vmem:[#allocation8 + $0x48] sm:$0xff]
    %v236 = vld [vmem:[#allocation8 + $0x50] sm:$0xff]
    %v237 = vld [vmem:[#allocation8 + $0x58] sm:$0xff]
    %v238 = vld [vmem:[#allocation8 + $0x60] sm:$0xff]
    %v239 = vld [vmem:[#allocation8 + $0x68] sm:$0xff]
    %v240 = vld [vmem:[#allocation8 + $0x70] sm:$0xff]
    %v241 = vld [vmem:[#allocation8 + $0x78] sm:$0xff]
    %v242 = vld [vmem:[%s5] sm:$0x1]
    %v244 = vlaneseq
    %v245 = vshrl.u32 %v244, 7
    %v246 = vsub.s32 0, %v245
    %v247 = vrot.slane %v242, %v246
    %249 = vmatprep.subr.mxu0 0.0
    %250 = vmatpush1.msra.mxu0 %v226
    %251 = vmatprep.subr.mxu0 0.0
    %252 = vmatpush1.msra.mxu0 %v227
    %253 = vmatprep.subr.mxu0 0.0
    %254 = vmatpush1.msra.mxu0 %v228
    %255 = vmatprep.subr.mxu0 0.0
    %256 = vmatpush1.msra.mxu0 %v229
    %257 = vmatprep.subr.mxu0 0.0
    %258 = vmatpush1.msra.mxu0 %v230
    %259 = vmatprep.subr.mxu0 0.0
    %260 = vmatpush1.msra.mxu0 %v231
    %261 = vmatprep.subr.mxu0 0.0
    %262 = vmatpush1.msra.mxu0 %v232
    %263 = vmatprep.subr.mxu0 0.0
    %264 = vmatpush1.msra.mxu0 %v233
    %265 = vmatprep.subr.mxu0 0.0
    %266 = vmatpush1.msra.mxu0 %v234
    %267 = vmatprep.subr.mxu0 0.0
    %268 = vmatpush1.msra.mxu0 %v235
    %269 = vmatprep.subr.mxu0 0.0
    %270 = vmatpush1.msra.mxu0 %v236
    %271 = vmatprep.subr.mxu0 0.0
    %272 = vmatpush1.msra.mxu0 %v237
    %273 = vmatprep.subr.mxu0 0.0
    %274 = vmatpush1.msra.mxu0 %v238
    %275 = vmatprep.subr.mxu0 0.0
    %276 = vmatpush1.msra.mxu0 %v239
    %277 = vmatprep.subr.mxu0 0.0
    %278 = vmatpush1.msra.mxu0 %v240
    %279 = vmatprep.subr.mxu0 0.0
    %280 = vmatpush1.msra.mxu0 %v241
    %281 = vmatprep.subr.mxu0 0.0
    %282 = vmatpush1.msra.mxu0 0.0
    %283 = vmatprep.subr.mxu0 0.0
    %284 = vmatpush1.msra.mxu0 0.0
    %285 = vmatprep.subr.mxu0 0.0
    %286 = vmatpush1.msra.mxu0 0.0
    %287 = vmatprep.subr.mxu0 0.0
    %288 = vmatpush1.msra.mxu0 0.0
    %289 = vmatprep.subr.mxu0 0.0
    %290 = vmatpush1.msra.mxu0 0.0
    %291 = vmatprep.subr.mxu0 0.0
    %292 = vmatpush1.msra.mxu0 0.0
    %293 = vmatprep.subr.mxu0 0.0
    %294 = vmatpush1.msra.mxu0 0.0
    %295 = vmatprep.subr.mxu0 0.0
    %296 = vmatpush1.msra.mxu0 0.0
    %297 = vmatprep.subr.mxu0 0.0
    %298 = vmatpush1.msra.mxu0 0.0
    %299 = vmatprep.subr.mxu0 0.0
    %300 = vmatpush1.msra.mxu0 0.0
    %301 = vmatprep.subr.mxu0 0.0
    %302 = vmatpush1.msra.mxu0 0.0
    %303 = vmatprep.subr.mxu0 0.0
    %304 = vmatpush1.msra.mxu0 0.0
    %305 = vmatprep.subr.mxu0 0.0
    %306 = vmatpush1.msra.mxu0 0.0
    %307 = vmatprep.subr.mxu0 0.0
    %308 = vmatpush1.msra.mxu0 0.0
    %309 = vmatprep.subr.mxu0 0.0
    %310 = vmatpush1.msra.mxu0 0.0
    %311 = vmatprep.subr.mxu0 0.0
    %312 = vmatpush1.msra.mxu0 0.0
    %313 = vmatprep.mubr.f32.mxu0 0.0
    %314 = vmatmul.mubr.f32.gmra.mrb[0].mxu0 %v225
    %v315 = vpop.f32.mrb[0].mxu0
    %v316 = vadd.f32 %v247, %v315
    %v317 = vpop.f32.mrb[0].mxu0
    %318 = vdwg.mxu0
    %v319 = vmul.f32 %v316, 0.01
    %v320 = vmax.f32 %v316, %v319
    %v321 = vld [vmem:[#allocation10] sm:$0xff]
    %v322 = vld [vmem:[#allocation10 + $0x8] sm:$0xff]
    %v323 = vld [vmem:[#allocation10 + $0x10] sm:$0xff]
    %v324 = vld [vmem:[#allocation10 + $0x18] sm:$0xff]
    %v325 = vld [vmem:[#allocation10 + $0x20] sm:$0xff]
    %v326 = vld [vmem:[#allocation10 + $0x28] sm:$0xff]
    %v327 = vld [vmem:[#allocation10 + $0x30] sm:$0xff]
    %v328 = vld [vmem:[#allocation10 + $0x38] sm:$0xff]
    %v329 = vld [vmem:[#allocation10 + $0x40] sm:$0xff]
    %v330 = vld [vmem:[#allocation10 + $0x48] sm:$0xff]
    %v331 = vld [vmem:[#allocation10 + $0x50] sm:$0xff]
    %v332 = vld [vmem:[#allocation10 + $0x58] sm:$0xff]
    %v333 = vld [vmem:[#allocation10 + $0x60] sm:$0xff]
    %v334 = vld [vmem:[#allocation10 + $0x68] sm:$0xff]
    %v335 = vld [vmem:[#allocation10 + $0x70] sm:$0xff]
    %v336 = vld [vmem:[#allocation10 + $0x78] sm:$0xff]
    %v337 = vld [vmem:[#allocation11] sm:$0xff]
    %v338 = vld [vmem:[#allocation11 + $0x8] sm:$0xff]
    %v339 = vld [vmem:[#allocation11 + $0x10] sm:$0xff]
    %v340 = vld [vmem:[#allocation11 + $0x18] sm:$0xff]
    %v341 = vld [vmem:[#allocation11 + $0x20] sm:$0xff]
    %v342 = vld [vmem:[#allocation11 + $0x28] sm:$0xff]
    %v343 = vld [vmem:[#allocation11 + $0x30] sm:$0xff]
    %v344 = vld [vmem:[#allocation11 + $0x38] sm:$0xff]
    %v345 = vld [vmem:[#allocation11 + $0x40] sm:$0xff]
    %v346 = vld [vmem:[#allocation11 + $0x48] sm:$0xff]
    %v347 = vld [vmem:[#allocation11 + $0x50] sm:$0xff]
    %v348 = vld [vmem:[#allocation11 + $0x58] sm:$0xff]
    %v349 = vld [vmem:[#allocation11 + $0x60] sm:$0xff]
    %v350 = vld [vmem:[#allocation11 + $0x68] sm:$0xff]
    %v351 = vld [vmem:[#allocation11 + $0x70] sm:$0xff]
    %v352 = vld [vmem:[#allocation11 + $0x78] sm:$0xff]
    %v353 = vld [vmem:[%s8] sm:$0x1]
    %v354 = vld [vmem:[#allocation5] sm:$0xff]
    %355 = vmatprep.subr.mxu0 0.0
    %356 = vmatpush1.msra.mxu0 %v337
    %357 = vmatprep.subr.mxu0 0.0
    %358 = vmatpush1.msra.mxu0 %v338
    %359 = vmatprep.subr.mxu0 0.0
    %360 = vmatpush1.msra.mxu0 %v339
    %361 = vmatprep.subr.mxu0 0.0
    %362 = vmatpush1.msra.mxu0 %v340
    %363 = vmatprep.subr.mxu0 0.0
    %364 = vmatpush1.msra.mxu0 %v341
    %365 = vmatprep.subr.mxu0 0.0
    %366 = vmatpush1.msra.mxu0 %v342
    %367 = vmatprep.subr.mxu0 0.0
    %368 = vmatpush1.msra.mxu0 %v343
    %369 = vmatprep.subr.mxu0 0.0
    %370 = vmatpush1.msra.mxu0 %v344
    %371 = vmatprep.subr.mxu0 0.0
    %372 = vmatpush1.msra.mxu0 %v345
    %373 = vmatprep.subr.mxu0 0.0
    %374 = vmatpush1.msra.mxu0 %v346
    %375 = vmatprep.subr.mxu0 0.0
    %376 = vmatpush1.msra.mxu0 %v347
    %377 = vmatprep.subr.mxu0 0.0
    %378 = vmatpush1.msra.mxu0 %v348
    %379 = vmatprep.subr.mxu0 0.0
    %380 = vmatpush1.msra.mxu0 %v349
    %381 = vmatprep.subr.mxu0 0.0
    %382 = vmatpush1.msra.mxu0 %v350
    %383 = vmatprep.subr.mxu0 0.0
    %384 = vmatpush1.msra.mxu0 %v351
    %385 = vmatprep.subr.mxu0 0.0
    %386 = vmatpush1.msra.mxu0 %v352
    %387 = vmatprep.subr.mxu0 0.0
    %388 = vmatpush1.msra.mxu0 0.0
    %389 = vmatprep.subr.mxu0 0.0
    %390 = vmatpush1.msra.mxu0 0.0
    %391 = vmatprep.subr.mxu0 0.0
    %392 = vmatpush1.msra.mxu0 0.0
    %393 = vmatprep.subr.mxu0 0.0
    %394 = vmatpush1.msra.mxu0 0.0
    %395 = vmatprep.subr.mxu0 0.0
    %396 = vmatpush1.msra.mxu0 0.0
    %397 = vmatprep.subr.mxu0 0.0
    %398 = vmatpush1.msra.mxu0 0.0
    %399 = vmatprep.subr.mxu0 0.0
    %400 = vmatpush1.msra.mxu0 0.0
    %401 = vmatprep.subr.mxu0 0.0
    %402 = vmatpush1.msra.mxu0 0.0
    %403 = vmatprep.subr.mxu0 0.0
    %404 = vmatpush1.msra.mxu0 0.0
    %405 = vmatprep.subr.mxu0 0.0
    %406 = vmatpush1.msra.mxu0 0.0
    %407 = vmatprep.subr.mxu0 0.0
    %408 = vmatpush1.msra.mxu0 0.0
    %409 = vmatprep.subr.mxu0 0.0
    %410 = vmatpush1.msra.mxu0 0.0
    %411 = vmatprep.subr.mxu0 0.0
    %412 = vmatpush1.msra.mxu0 0.0
    %413 = vmatprep.subr.mxu0 0.0
    %414 = vmatpush1.msra.mxu0 0.0
    %415 = vmatprep.subr.mxu0 0.0
    %416 = vmatpush1.msra.mxu0 0.0
    %417 = vmatprep.subr.mxu0 0.0
    %418 = vmatpush1.msra.mxu0 0.0
    %419 = vmatprep.mubr.f32.mxu0 0.0
    %420 = vmatmul.mubr.f32.gmra.mrb[0].mxu0 %v354
    %v421 = vpop.f32.mrb[0].mxu0
    %v422 = vadd.f32 0.0, %v421
    %v423 = vpop.f32.mrb[0].mxu0
    %424 = vdwg.mxu0
    %425 = vmatprep.subr.mxu0 0.0
    %426 = vmatpush1.msra.mxu0 %v321
    %427 = vmatprep.subr.mxu0 0.0
    %428 = vmatpush1.msra.mxu0 %v322
    %429 = vmatprep.subr.mxu0 0.0
    %430 = vmatpush1.msra.mxu0 %v323
    %431 = vmatprep.subr.mxu0 0.0
    %432 = vmatpush1.msra.mxu0 %v324
    %433 = vmatprep.subr.mxu0 0.0
    %434 = vmatpush1.msra.mxu0 %v325
    %435 = vmatprep.subr.mxu0 0.0
    %436 = vmatpush1.msra.mxu0 %v326
    %437 = vmatprep.subr.mxu0 0.0
    %438 = vmatpush1.msra.mxu0 %v327
    %439 = vmatprep.subr.mxu0 0.0
    %440 = vmatpush1.msra.mxu0 %v328
    %441 = vmatprep.subr.mxu0 0.0
    %442 = vmatpush1.msra.mxu0 %v329
    %443 = vmatprep.subr.mxu0 0.0
    %444 = vmatpush1.msra.mxu0 %v330
    %445 = vmatprep.subr.mxu0 0.0
    %446 = vmatpush1.msra.mxu0 %v331
    %447 = vmatprep.subr.mxu0 0.0
    %448 = vmatpush1.msra.mxu0 %v332
    %449 = vmatprep.subr.mxu0 0.0
    %450 = vmatpush1.msra.mxu0 %v333
    %451 = vmatprep.subr.mxu0 0.0
    %452 = vmatpush1.msra.mxu0 %v334
    %453 = vmatprep.subr.mxu0 0.0
    %454 = vmatpush1.msra.mxu0 %v335
    %455 = vmatprep.subr.mxu0 0.0
    %456 = vmatpush1.msra.mxu0 %v336
    %457 = vmatprep.subr.mxu0 0.0
    %458 = vmatpush1.msra.mxu0 0.0
    %459 = vmatprep.subr.mxu0 0.0
    %460 = vmatpush1.msra.mxu0 0.0
    %461 = vmatprep.subr.mxu0 0.0
    %462 = vmatpush1.msra.mxu0 0.0
    %463 = vmatprep.subr.mxu0 0.0
    %464 = vmatpush1.msra.mxu0 0.0
    %465 = vmatprep.subr.mxu0 0.0
    %466 = vmatpush1.msra.mxu0 0.0
    %467 = vmatprep.subr.mxu0 0.0
    %468 = vmatpush1.msra.mxu0 0.0
    %469 = vmatprep.subr.mxu0 0.0
    %470 = vmatpush1.msra.mxu0 0.0
    %471 = vmatprep.subr.mxu0 0.0
    %472 = vmatpush1.msra.mxu0 0.0
    %473 = vmatprep.subr.mxu0 0.0
    %474 = vmatpush1.msra.mxu0 0.0
    %475 = vmatprep.subr.mxu0 0.0
    %476 = vmatpush1.msra.mxu0 0.0
    %477 = vmatprep.subr.mxu0 0.0
    %478 = vmatpush1.msra.mxu0 0.0
    %479 = vmatprep.subr.mxu0 0.0
    %480 = vmatpush1.msra.mxu0 0.0
    %481 = vmatprep.subr.mxu0 0.0
    %482 = vmatpush1.msra.mxu0 0.0
    %483 = vmatprep.subr.mxu0 0.0
    %484 = vmatpush1.msra.mxu0 0.0
    %485 = vmatprep.subr.mxu0 0.0
    %486 = vmatpush1.msra.mxu0 0.0
    %487 = vmatprep.subr.mxu0 0.0
    %488 = vmatpush1.msra.mxu0 0.0
    %489 = vmatprep.mubr.f32.mxu0 0.0
    %490 = vmatmul.mubr.f32.gmra.mrb[0].mxu0 %v320
    %v491 = vpop.f32.mrb[0].mxu0
    %v492 = vadd.f32 %v422, %v491
    %v493 = vpop.f32.mrb[0].mxu0
    %494 = vdwg.mxu0
    %v496 = vlaneseq
    %v497 = vshrl.u32 %v496, 7
    %v498 = vsub.s32 0, %v497
    %v499 = vrot.slane %v353, %v498
    %v501 = vadd.f32 %v492, %v499
    %v502 = vmul.f32 %v501, 0.01
    %v503 = vmax.f32 %v501, %v502
    %v504 = vld [vmem:[#allocation13] sm:$0xff]
    %v505 = vld [vmem:[#allocation13 + $0x8] sm:$0xff]
    %v506 = vld [vmem:[#allocation13 + $0x10] sm:$0xff]
    %v507 = vld [vmem:[#allocation13 + $0x18] sm:$0xff]
    %v508 = vld [vmem:[#allocation13 + $0x20] sm:$0xff]
    %v509 = vld [vmem:[#allocation13 + $0x28] sm:$0xff]
    %v510 = vld [vmem:[#allocation13 + $0x30] sm:$0xff]
    %v511 = vld [vmem:[#allocation13 + $0x38] sm:$0xff]
    %v512 = vld [vmem:[#allocation13 + $0x40] sm:$0xff]
    %v513 = vld [vmem:[#allocation13 + $0x48] sm:$0xff]
    %v514 = vld [vmem:[#allocation13 + $0x50] sm:$0xff]
    %v515 = vld [vmem:[#allocation13 + $0x58] sm:$0xff]
    %v516 = vld [vmem:[#allocation13 + $0x60] sm:$0xff]
    %v517 = vld [vmem:[#allocation13 + $0x68] sm:$0xff]
    %v518 = vld [vmem:[#allocation13 + $0x70] sm:$0xff]
    %v519 = vld [vmem:[#allocation13 + $0x78] sm:$0xff]
    %v520 = vld [vmem:[%s10] sm:$0x1]
    %v522 = vlaneseq
    %v523 = vshrl.u32 %v522, 7
    %v524 = vsub.s32 0, %v523
    %v525 = vrot.slane %v520, %v524
    %527 = vmatprep.subr.mxu0 0.0
    %528 = vmatpush1.msra.mxu0 %v504
    %529 = vmatprep.subr.mxu0 0.0
    %530 = vmatpush1.msra.mxu0 %v505
    %531 = vmatprep.subr.mxu0 0.0
    %532 = vmatpush1.msra.mxu0 %v506
    %533 = vmatprep.subr.mxu0 0.0
    %534 = vmatpush1.msra.mxu0 %v507
    %535 = vmatprep.subr.mxu0 0.0
    %536 = vmatpush1.msra.mxu0 %v508
    %537 = vmatprep.subr.mxu0 0.0
    %538 = vmatpush1.msra.mxu0 %v509
    %539 = vmatprep.subr.mxu0 0.0
    %540 = vmatpush1.msra.mxu0 %v510
    %541 = vmatprep.subr.mxu0 0.0
    %542 = vmatpush1.msra.mxu0 %v511
    %543 = vmatprep.subr.mxu0 0.0
    %544 = vmatpush1.msra.mxu0 %v512
    %545 = vmatprep.subr.mxu0 0.0
    %546 = vmatpush1.msra.mxu0 %v513
    %547 = vmatprep.subr.mxu0 0.0
    %548 = vmatpush1.msra.mxu0 %v514
    %549 = vmatprep.subr.mxu0 0.0
    %550 = vmatpush1.msra.mxu0 %v515
    %551 = vmatprep.subr.mxu0 0.0
    %552 = vmatpush1.msra.mxu0 %v516
    %553 = vmatprep.subr.mxu0 0.0
    %554 = vmatpush1.msra.mxu0 %v517
    %555 = vmatprep.subr.mxu0 0.0
    %556 = vmatpush1.msra.mxu0 %v518
    %557 = vmatprep.subr.mxu0 0.0
    %558 = vmatpush1.msra.mxu0 %v519
    %559 = vmatprep.subr.mxu0 0.0
    %560 = vmatpush1.msra.mxu0 0.0
    %561 = vmatprep.subr.mxu0 0.0
    %562 = vmatpush1.msra.mxu0 0.0
    %563 = vmatprep.subr.mxu0 0.0
    %564 = vmatpush1.msra.mxu0 0.0
    %565 = vmatprep.subr.mxu0 0.0
    %566 = vmatpush1.msra.mxu0 0.0
    %567 = vmatprep.subr.mxu0 0.0
    %568 = vmatpush1.msra.mxu0 0.0
    %569 = vmatprep.subr.mxu0 0.0
    %570 = vmatpush1.msra.mxu0 0.0
    %571 = vmatprep.subr.mxu0 0.0
    %572 = vmatpush1.msra.mxu0 0.0
    %573 = vmatprep.subr.mxu0 0.0
    %574 = vmatpush1.msra.mxu0 0.0
    %575 = vmatprep.subr.mxu0 0.0
    %576 = vmatpush1.msra.mxu0 0.0
    %577 = vmatprep.subr.mxu0 0.0
    %578 = vmatpush1.msra.mxu0 0.0
    %579 = vmatprep.subr.mxu0 0.0
    %580 = vmatpush1.msra.mxu0 0.0
    %581 = vmatprep.subr.mxu0 0.0
    %582 = vmatpush1.msra.mxu0 0.0
    %583 = vmatprep.subr.mxu0 0.0
    %584 = vmatpush1.msra.mxu0 0.0
    %585 = vmatprep.subr.mxu0 0.0
    %586 = vmatpush1.msra.mxu0 0.0
    %587 = vmatprep.subr.mxu0 0.0
    %588 = vmatpush1.msra.mxu0 0.0
    %589 = vmatprep.subr.mxu0 0.0
    %590 = vmatpush1.msra.mxu0 0.0
    %591 = vmatprep.mubr.f32.mxu0 0.0
    %592 = vmatmul.mubr.f32.gmra.mrb[0].mxu0 %v503
    %v593 = vpop.f32.mrb[0].mxu0
    %v594 = vadd.f32 %v525, %v593
    %v595 = vpop.f32.mrb[0].mxu0
    %596 = vdwg.mxu0
    %597 = vst [vmem:[#allocation14] sm:$0xff] %v594
    // Predicated region
    $region74: #{tpu_custom_call.1} parent=1 // pred_check
      _
    $region75: #{tpu_custom_call.1} parent=1 // pred_check_branch
      %599 = sbr.rel (0) target = $region77
    $region76: #{tpu_custom_call.1} parent=1 // pred_region
      %s601 = ssub.s32 128, 128
      %602 = vsyncadd [#allocation4], %s601
      %s604 = sshll.u32 [#allocation14], 4
      %s605 = int_to_ptr.vmem [resolvable:$true] %s604
      %607 = dma.vmem_to_hbm [thread:$0]  %s605, 128, %s11, [#allocation4]
    $region77: #{tpu_custom_call.1} parent=1 // pred_fallthru
      _
    // Predicated region
    $region78: #{tpu_custom_call.1} parent=1 // pred_check
      _
    $region79: #{tpu_custom_call.1} parent=1 // pred_check_branch
      %609 = sbr.rel (0) target = $region81
    $region80: #{tpu_custom_call.1} parent=1 // pred_region
      %610 = dma.done [#allocation4], 128
    $region81: #{tpu_custom_call.1} parent=1 // pred_fallthru
      _
    %611 = vsyncpa [#allocation3], 1
    %612 = vsyncpa [#allocation6], 1
    %613 = vsyncpa [#allocation9], 1
    %614 = vsyncpa [#allocation12], 1
    %615 = vsyncpa [#allocation4], 1

// kernel: tpu_custom_call.1
$region0: #{tpu_custom_call.1}
  #allocation0 [shape = 'u32[]', space=smem, size = 0x4, offset = 0x4, fixed_abs, tag = 'smem constant byte address 0x4 - core index']
  #allocation1 [shape = 'u32[144,128]{1,0:T(1,128)}', space=vmem, size = 0x12000, scoped, tag = 'internal scratch']
  %s0 = inlined_call_operand.hbm [shape: f32[8,128], index: 0, kind: input, shape index: {}]
  %s1 = inlined_call_operand.hbm [shape: f32[8,128], index: 1, kind: input, shape index: {}]
  %s2 = inlined_call_operand.hbm [shape: f32[128,128], index: 2, kind: input, shape index: {}]
  %s3 = inlined_call_operand.vmem [shape: f32[1,128], index: 3, kind: input, shape index: {}]
  %s4 = inlined_call_operand.hbm [shape: f32[128,128], index: 4, kind: input, shape index: {}]
  %s5 = inlined_call_operand.vmem [shape: f32[1,128], index: 5, kind: input, shape index: {}]
  %s6 = inlined_call_operand.hbm [shape: f32[128,128], index: 6, kind: input, shape index: {}]
  %s7 = inlined_call_operand.hbm [shape: f32[128,128], index: 7, kind: input, shape index: {}]
  %s8 = inlined_call_operand.vmem [shape: f32[1,128], index: 8, kind: input, shape index: {}]
  %s9 = inlined_call_operand.hbm [shape: f32[128,128], index: 9, kind: input, shape index: {}]
  %s10 = inlined_call_operand.vmem [shape: f32[1,128], index: 10, kind: input, shape index: {}]
  %s11 = inlined_call_operand.hbm [shape: f32[8,128], index: 11, kind: output, shape index: {}]
  %s12 = sld [smem:[#allocation0]]
  $region82: #{tpu_custom_call.1} parent=0
    _
  %s14 = ssub.s32 1, %s12
  %s15 = scalar_select 0, %s14, %s12
  $region1: #{tpu_custom_call.1} parent=0
    #allocation2 [shape = 'u8[4096]{0}', space=vmem, size = 0x1000, scoped, tag = 'input window, operand 0, single buffered']
    #allocation3 [shape = 's32[1]{0}', space=sflag, size = 0x4, scoped, tag = 'scoped memory for tpu_custom_call.1']
    #allocation4 [shape = 's32[1]{0}', space=sflag, size = 0x4, scoped, tag = 'scoped memory for tpu_custom_call.1']
    #allocation5 [shape = 'u8[4096]{0}', space=vmem, size = 0x1000, scoped, tag = 'input window, operand 1, single buffered']
    #allocation6 [shape = 's32[1]{0}', space=sflag, size = 0x4, scoped, tag = 'scoped memory for tpu_custom_call.1']
    #allocation7 [shape = 'u8[65536]{0}', space=vmem, size = 0x10000, scoped, tag = 'input window, operand 2, single buffered']
    #allocation8 [shape = 'u8[65536]{0}', space=vmem, size = 0x10000, scoped, tag = 'input window, operand 4, single buffered']
    #allocation9 [shape = 's32[1]{0}', space=sflag, size = 0x4, scoped, tag = 'scoped memory for tpu_custom_call.1']
    #allocation10 [shape = 'u8[65536]{0}', space=vmem, size = 0x10000, scoped, tag = 'input window, operand 6, single buffered']
    #allocation11 [shape = 'u8[65536]{0}', space=vmem, size = 0x10000, scoped, tag = 'input window, operand 7, single buffered']
    #allocation12 [shape = 's32[1]{0}', space=sflag, size = 0x4, scoped, tag = 'scoped memory for tpu_custom_call.1']
    #allocation13 [shape = 'u8[65536]{0}', space=vmem, size = 0x10000, scoped, tag = 'input window, operand 9, single buffered']
    #allocation14 [shape = 'u8[4096]{0}', space=vmem, size = 0x1000, scoped, tag = 'output window, operand 0, single buffered']
    %16 = vsyncpa [#allocation3], 0
    %17 = vsyncpa [#allocation6], 0
    %18 = vsyncpa [#allocation9], 0
    %19 = vsyncpa [#allocation12], 0
    %20 = vsyncpa [#allocation4], 0
    // Predicated region
    $region2: #{tpu_custom_call.1} parent=1 // pred_check
      _
    $region3: #{tpu_custom_call.1} parent=1 // pred_check_branch
      %22 = sbr.rel (0) target = $region5
    $region4: #{tpu_custom_call.1} parent=1 // pred_region
      %s24 = ssub.s32 128, 128
      %25 = vsyncadd [#allocation3], %s24
      %s27 = sshll.u32 [#allocation2], 4
      %s28 = int_to_ptr.vmem [resolvable:$true] %s27
      %30 = dma.hbm_to_vmem [thread:$0]  %s0, 128, %s28, [#allocation3]
    $region5: #{tpu_custom_call.1} parent=1 // pred_fallthru
      _
    // Predicated region
    $region6: #{tpu_custom_call.1} parent=1 // pred_check
      _
    $region7: #{tpu_custom_call.1} parent=1 // pred_check_branch
      %32 = sbr.rel (0) target = $region9
    $region8: #{tpu_custom_call.1} parent=1 // pred_region
      %s34 = ssub.s32 128, 128
      %35 = vsyncadd [#allocation6], %s34
      %s37 = sshll.u32 [#allocation5], 4
      %s38 = int_to_ptr.vmem [resolvable:$true] %s37
      %40 = dma.hbm_to_vmem [thread:$0]  %s1, 128, %s38, [#allocation6]
    $region9: #{tpu_custom_call.1} parent=1 // pred_fallthru
      _
    // Predicated region
    $region10: #{tpu_custom_call.1} parent=1 // pred_check
      _
    $region11: #{tpu_custom_call.1} parent=1 // pred_check_branch
      %42 = sbr.rel (0) target = $region13
    $region12: #{tpu_custom_call.1} parent=1 // pred_region
      %s44 = ssub.s32 2048, 2048
      %45 = vsyncadd [#allocation6], %s44
      %s46 = sshll.u32 [#allocation7], 4
      %s47 = int_to_ptr.vmem [resolvable:$true] %s46
      %52 = dma.hbm_to_vmem [thread:$0]  %s2, 2048, %s47, [#allocation6], 128, 128, 8
    $region13: #{tpu_custom_call.1} parent=1 // pred_fallthru
      _
    // Predicated region
    $region14: #{tpu_custom_call.1} parent=1 // pred_check
      _
    $region15: #{tpu_custom_call.1} parent=1 // pred_check_branch
      %54 = sbr.rel (0) target = $region17
    $region16: #{tpu_custom_call.1} parent=1 // pred_region
      _
    $region17: #{tpu_custom_call.1} parent=1 // pred_fallthru
      _
    // Predicated region
    $region18: #{tpu_custom_call.1} parent=1 // pred_check
      _
    $region19: #{tpu_custom_call.1} parent=1 // pred_check_branch
      %56 = sbr.rel (0) target = $region21
    $region20: #{tpu_custom_call.1} parent=1 // pred_region
      %s58 = ssub.s32 2048, 2048
      %59 = vsyncadd [#allocation9], %s58
      %s60 = sshll.u32 [#allocation8], 4
      %s61 = int_to_ptr.vmem [resolvable:$true] %s60
      %66 = dma.hbm_to_vmem [thread:$0]  %s4, 2048, %s61, [#allocation9], 128, 128, 8
    $region21: #{tpu_custom_call.1} parent=1 // pred_fallthru
      _
    // Predicated region
    $region22: #{tpu_custom_call.1} parent=1 // pred_check
      _
    $region23: #{tpu_custom_call.1} parent=1 // pred_check_branch
      %68 = sbr.rel (0) target = $region25
    $region24: #{tpu_custom_call.1} parent=1 // pred_region
      _
    $region25: #{tpu_custom_call.1} parent=1 // pred_fallthru
      _
    // Predicated region
    $region26: #{tpu_custom_call.1} parent=1 // pred_check
      _
    $region27: #{tpu_custom_call.1} parent=1 // pred_check_branch
      %70 = sbr.rel (0) target = $region29
    $region28: #{tpu_custom_call.1} parent=1 // pred_region
      %s72 = ssub.s32 2048, 2048
      %73 = vsyncadd [#allocation9], %s72
      %s74 = sshll.u32 [#allocation10], 4
      %s75 = int_to_ptr.vmem [resolvable:$true] %s74
      %80 = dma.hbm_to_vmem [thread:$0]  %s6, 2048, %s75, [#allocation9], 128, 128, 8
    $region29: #{tpu_custom_call.1} parent=1 // pred_fallthru
      _
    // Predicated region
    $region30: #{tpu_custom_call.1} parent=1 // pred_check
      _
    $region31: #{tpu_custom_call.1} parent=1 // pred_check_branch
      %82 = sbr.rel (0) target = $region33
    $region32: #{tpu_custom_call.1} parent=1 // pred_region
      %s84 = ssub.s32 2048, 2048
      %85 = vsyncadd [#allocation12], %s84
      %s86 = sshll.u32 [#allocation11], 4
      %s87 = int_to_ptr.vmem [resolvable:$true] %s86
      %92 = dma.hbm_to_vmem [thread:$0]  %s7, 2048, %s87, [#allocation12], 128, 128, 8
    $region33: #{tpu_custom_call.1} parent=1 // pred_fallthru
      _
    // Predicated region
    $region34: #{tpu_custom_call.1} parent=1 // pred_check
      _
    $region35: #{tpu_custom_call.1} parent=1 // pred_check_branch
      %94 = sbr.rel (0) target = $region37
    $region36: #{tpu_custom_call.1} parent=1 // pred_region
      _
    $region37: #{tpu_custom_call.1} parent=1 // pred_fallthru
      _
    // Predicated region
    $region38: #{tpu_custom_call.1} parent=1 // pred_check
      _
    $region39: #{tpu_custom_call.1} parent=1 // pred_check_branch
      %96 = sbr.rel (0) target = $region41
    $region40: #{tpu_custom_call.1} parent=1 // pred_region
      %s98 = ssub.s32 2048, 2048
      %99 = vsyncadd [#allocation12], %s98
      %s100 = sshll.u32 [#allocation13], 4
      %s101 = int_to_ptr.vmem [resolvable:$true] %s100
      %106 = dma.hbm_to_vmem [thread:$0]  %s9, 2048, %s101, [#allocation12], 128, 128, 8
    $region41: #{tpu_custom_call.1} parent=1 // pred_fallthru
      _
    // Predicated region
    $region42: #{tpu_custom_call.1} parent=1 // pred_check
      _
    $region43: #{tpu_custom_call.1} parent=1 // pred_check_branch
      %108 = sbr.rel (0) target = $region45
    $region44: #{tpu_custom_call.1} parent=1 // pred_region
      _
    $region45: #{tpu_custom_call.1} parent=1 // pred_fallthru
      _
    // Predicated region
    $region46: #{tpu_custom_call.1} parent=1 // pred_check
      _
    $region47: #{tpu_custom_call.1} parent=1 // pred_check_branch
      %110 = sbr.rel (0) target = $region49
    $region48: #{tpu_custom_call.1} parent=1 // pred_region
      %111 = dma.done [#allocation3], 128
    $region49: #{tpu_custom_call.1} parent=1 // pred_fallthru
      _
    // Predicated region
    $region50: #{tpu_custom_call.1} parent=1 // pred_check
      _
    $region51: #{tpu_custom_call.1} parent=1 // pred_check_branch
      %113 = sbr.rel (0) target = $region53
    $region52: #{tpu_custom_call.1} parent=1 // pred_region
      %114 = dma.done [#allocation6], 128
    $region53: #{tpu_custom_call.1} parent=1 // pred_fallthru
      _
    // Predicated region
    $region54: #{tpu_custom_call.1} parent=1 // pred_check
      _
    $region55: #{tpu_custom_call.1} parent=1 // pred_check_branch
      %116 = sbr.rel (0) target = $region57
    $region56: #{tpu_custom_call.1} parent=1 // pred_region
      %117 = dma.done [#allocation6], 2048
    $region57: #{tpu_custom_call.1} parent=1 // pred_fallthru
      _
    // Predicated region
    $region58: #{tpu_custom_call.1} parent=1 // pred_check
      _
    $region59: #{tpu_custom_call.1} parent=1 // pred_check_branch
      %119 = sbr.rel (0) target = $region61
    $region60: #{tpu_custom_call.1} parent=1 // pred_region
      %120 = dma.done [#allocation9], 2048
    $region61: #{tpu_custom_call.1} parent=1 // pred_fallthru
      _
    // Predicated region
    $region62: #{tpu_custom_call.1} parent=1 // pred_check
      _
    $region63: #{tpu_custom_call.1} parent=1 // pred_check_branch
      %122 = sbr.rel (0) target = $region65
    $region64: #{tpu_custom_call.1} parent=1 // pred_region
      %123 = dma.done [#allocation9], 2048
    $region65: #{tpu_custom_call.1} parent=1 // pred_fallthru
      _
    // Predicated region
    $region66: #{tpu_custom_call.1} parent=1 // pred_check
      _
    $region67: #{tpu_custom_call.1} parent=1 // pred_check_branch
      %125 = sbr.rel (0) target = $region69
    $region68: #{tpu_custom_call.1} parent=1 // pred_region
      %126 = dma.done [#allocation12], 2048
    $region69: #{tpu_custom_call.1} parent=1 // pred_fallthru
      _
    // Predicated region
    $region70: #{tpu_custom_call.1} parent=1 // pred_check
      _
    $region71: #{tpu_custom_call.1} parent=1 // pred_check_branch
      %128 = sbr.rel (0) target = $region73
    $region72: #{tpu_custom_call.1} parent=1 // pred_region
      %129 = dma.done [#allocation12], 2048
    $region73: #{tpu_custom_call.1} parent=1 // pred_fallthru
      _
    %v130 = vld [vmem:[#allocation7] sm:$0xff]
    %v131 = vld [vmem:[#allocation7 + $0x8] sm:$0xff]
    %v132 = vld [vmem:[#allocation7 + $0x10] sm:$0xff]
    %v133 = vld [vmem:[#allocation7 + $0x18] sm:$0xff]
    %v134 = vld [vmem:[#allocation7 + $0x20] sm:$0xff]
    %v135 = vld [vmem:[#allocation7 + $0x28] sm:$0xff]
    %v136 = vld [vmem:[#allocation7 + $0x30] sm:$0xff]
    %v137 = vld [vmem:[#allocation7 + $0x38] sm:$0xff]
    %v138 = vld [vmem:[#allocation7 + $0x40] sm:$0xff]
    %v139 = vld [vmem:[#allocation7 + $0x48] sm:$0xff]
    %v140 = vld [vmem:[#allocation7 + $0x50] sm:$0xff]
    %v141 = vld [vmem:[#allocation7 + $0x58] sm:$0xff]
    %v142 = vld [vmem:[#allocation7 + $0x60] sm:$0xff]
    %v143 = vld [vmem:[#allocation7 + $0x68] sm:$0xff]
    %v144 = vld [vmem:[#allocation7 + $0x70] sm:$0xff]
    %v145 = vld [vmem:[#allocation7 + $0x78] sm:$0xff]
    %v146 = vld [vmem:[%s3] sm:$0x1]
    %v147 = vld [vmem:[#allocation2] sm:$0xff]
    %v149 = vlaneseq
    %v150 = vshrl.u32 %v149, 7
    %v151 = vsub.s32 0, %v150
    %v152 = vrot.slane %v146, %v151
    %154 = vmatprep.subr.mxu0 0.0
    %155 = vmatpush1.msra.mxu0 %v130
    %156 = vmatprep.subr.mxu0 0.0
    %157 = vmatpush1.msra.mxu0 %v131
    %158 = vmatprep.subr.mxu0 0.0
    %159 = vmatpush1.msra.mxu0 %v132
    %160 = vmatprep.subr.mxu0 0.0
    %161 = vmatpush1.msra.mxu0 %v133
    %162 = vmatprep.subr.mxu0 0.0
    %163 = vmatpush1.msra.mxu0 %v134
    %164 = vmatprep.subr.mxu0 0.0
    %165 = vmatpush1.msra.mxu0 %v135
    %166 = vmatprep.subr.mxu0 0.0
    %167 = vmatpush1.msra.mxu0 %v136
    %168 = vmatprep.subr.mxu0 0.0
    %169 = vmatpush1.msra.mxu0 %v137
    %170 = vmatprep.subr.mxu0 0.0
    %171 = vmatpush1.msra.mxu0 %v138
    %172 = vmatprep.subr.mxu0 0.0
    %173 = vmatpush1.msra.mxu0 %v139
    %174 = vmatprep.subr.mxu0 0.0
    %175 = vmatpush1.msra.mxu0 %v140
    %176 = vmatprep.subr.mxu0 0.0
    %177 = vmatpush1.msra.mxu0 %v141
    %178 = vmatprep.subr.mxu0 0.0
    %179 = vmatpush1.msra.mxu0 %v142
    %180 = vmatprep.subr.mxu0 0.0
    %181 = vmatpush1.msra.mxu0 %v143
    %182 = vmatprep.subr.mxu0 0.0
    %183 = vmatpush1.msra.mxu0 %v144
    %184 = vmatprep.subr.mxu0 0.0
    %185 = vmatpush1.msra.mxu0 %v145
    %186 = vmatprep.subr.mxu0 0.0
    %187 = vmatpush1.msra.mxu0 0.0
    %188 = vmatprep.subr.mxu0 0.0
    %189 = vmatpush1.msra.mxu0 0.0
    %190 = vmatprep.subr.mxu0 0.0
    %191 = vmatpush1.msra.mxu0 0.0
    %192 = vmatprep.subr.mxu0 0.0
    %193 = vmatpush1.msra.mxu0 0.0
    %194 = vmatprep.subr.mxu0 0.0
    %195 = vmatpush1.msra.mxu0 0.0
    %196 = vmatprep.subr.mxu0 0.0
    %197 = vmatpush1.msra.mxu0 0.0
    %198 = vmatprep.subr.mxu0 0.0
    %199 = vmatpush1.msra.mxu0 0.0
    %200 = vmatprep.subr.mxu0 0.0
    %201 = vmatpush1.msra.mxu0 0.0
    %202 = vmatprep.subr.mxu0 0.0
    %203 = vmatpush1.msra.mxu0 0.0
    %204 = vmatprep.subr.mxu0 0.0
    %205 = vmatpush1.msra.mxu0 0.0
    %206 = vmatprep.subr.mxu0 0.0
    %207 = vmatpush1.msra.mxu0 0.0
    %208 = vmatprep.subr.mxu0 0.0
    %209 = vmatpush1.msra.mxu0 0.0
    %210 = vmatprep.subr.mxu0 0.0
    %211 = vmatpush1.msra.mxu0 0.0
    %212 = vmatprep.subr.mxu0 0.0
    %213 = vmatpush1.msra.mxu0 0.0
    %214 = vmatprep.subr.mxu0 0.0
    %215 = vmatpush1.msra.mxu0 0.0
    %216 = vmatprep.subr.mxu0 0.0
    %217 = vmatpush1.msra.mxu0 0.0
    %218 = vmatprep.mubr.f32.mxu0 0.0
    %219 = vmatmul.mubr.f32.gmra.mrb[0].mxu0 %v147
    %v220 = vpop.f32.mrb[0].mxu0
    %v221 = vadd.f32 %v152, %v220
    %v222 = vpop.f32.mrb[0].mxu0
    %223 = vdwg.mxu0
    %v224 = vmul.f32 %v221, 0.01
    %v225 = vmax.f32 %v221, %v224
    %v226 = vld [vmem:[#allocation8] sm:$0xff]
    %v227 = vld [vmem:[#allocation8 + $0x8] sm:$0xff]
    %v228 = vld [vmem:[#allocation8 + $0x10] sm:$0xff]
    %v229 = vld [vmem:[#allocation8 + $0x18] sm:$0xff]
    %v230 = vld [vmem:[#allocation8 + $0x20] sm:$0xff]
    %v231 = vld [vmem:[#allocation8 + $0x28] sm:$0xff]
    %v232 = vld [vmem:[#allocation8 + $0x30] sm:$0xff]
    %v233 = vld [vmem:[#allocation8 + $0x38] sm:$0xff]
    %v234 = vld [vmem:[#allocation8 + $0x40] sm:$0xff]
    %v235 = vld [vmem:[#allocation8 + $0x48] sm:$0xff]
    %v236 = vld [vmem:[#allocation8 + $0x50] sm:$0xff]
    %v237 = vld [vmem:[#allocation8 + $0x58] sm:$0xff]
    %v238 = vld [vmem:[#allocation8 + $0x60] sm:$0xff]
    %v239 = vld [vmem:[#allocation8 + $0x68] sm:$0xff]
    %v240 = vld [vmem:[#allocation8 + $0x70] sm:$0xff]
    %v241 = vld [vmem:[#allocation8 + $0x78] sm:$0xff]
    %v242 = vld [vmem:[%s5] sm:$0x1]
    %v244 = vlaneseq
    %v245 = vshrl.u32 %v244, 7
    %v246 = vsub.s32 0, %v245
    %v247 = vrot.slane %v242, %v246
    %249 = vmatprep.subr.mxu0 0.0
    %250 = vmatpush1.msra.mxu0 %v226
    %251 = vmatprep.subr.mxu0 0.0
    %252 = vmatpush1.msra.mxu0 %v227
    %253 = vmatprep.subr.mxu0 0.0
    %254 = vmatpush1.msra.mxu0 %v228
    %255 = vmatprep.subr.mxu0 0.0
    %256 = vmatpush1.msra.mxu0 %v229
    %257 = vmatprep.subr.mxu0 0.0
    %258 = vmatpush1.msra.mxu0 %v230
    %259 = vmatprep.subr.mxu0 0.0
    %260 = vmatpush1.msra.mxu0 %v231
    %261 = vmatprep.subr.mxu0 0.0
    %262 = vmatpush1.msra.mxu0 %v232
    %263 = vmatprep.subr.mxu0 0.0
    %264 = vmatpush1.msra.mxu0 %v233
    %265 = vmatprep.subr.mxu0 0.0
    %266 = vmatpush1.msra.mxu0 %v234
    %267 = vmatprep.subr.mxu0 0.0
    %268 = vmatpush1.msra.mxu0 %v235
    %269 = vmatprep.subr.mxu0 0.0
    %270 = vmatpush1.msra.mxu0 %v236
    %271 = vmatprep.subr.mxu0 0.0
    %272 = vmatpush1.msra.mxu0 %v237
    %273 = vmatprep.subr.mxu0 0.0
    %274 = vmatpush1.msra.mxu0 %v238
    %275 = vmatprep.subr.mxu0 0.0
    %276 = vmatpush1.msra.mxu0 %v239
    %277 = vmatprep.subr.mxu0 0.0
    %278 = vmatpush1.msra.mxu0 %v240
    %279 = vmatprep.subr.mxu0 0.0
    %280 = vmatpush1.msra.mxu0 %v241
    %281 = vmatprep.subr.mxu0 0.0
    %282 = vmatpush1.msra.mxu0 0.0
    %283 = vmatprep.subr.mxu0 0.0
    %284 = vmatpush1.msra.mxu0 0.0
    %285 = vmatprep.subr.mxu0 0.0
    %286 = vmatpush1.msra.mxu0 0.0
    %287 = vmatprep.subr.mxu0 0.0
    %288 = vmatpush1.msra.mxu0 0.0
    %289 = vmatprep.subr.mxu0 0.0
    %290 = vmatpush1.msra.mxu0 0.0
    %291 = vmatprep.subr.mxu0 0.0
    %292 = vmatpush1.msra.mxu0 0.0
    %293 = vmatprep.subr.mxu0 0.0
    %294 = vmatpush1.msra.mxu0 0.0
    %295 = vmatprep.subr.mxu0 0.0
    %296 = vmatpush1.msra.mxu0 0.0
    %297 = vmatprep.subr.mxu0 0.0
    %298 = vmatpush1.msra.mxu0 0.0
    %299 = vmatprep.subr.mxu0 0.0
    %300 = vmatpush1.msra.mxu0 0.0
    %301 = vmatprep.subr.mxu0 0.0
    %302 = vmatpush1.msra.mxu0 0.0
    %303 = vmatprep.subr.mxu0 0.0
    %304 = vmatpush1.msra.mxu0 0.0
    %305 = vmatprep.subr.mxu0 0.0
    %306 = vmatpush1.msra.mxu0 0.0
    %307 = vmatprep.subr.mxu0 0.0
    %308 = vmatpush1.msra.mxu0 0.0
    %309 = vmatprep.subr.mxu0 0.0
    %310 = vmatpush1.msra.mxu0 0.0
    %311 = vmatprep.subr.mxu0 0.0
    %312 = vmatpush1.msra.mxu0 0.0
    %313 = vmatprep.mubr.f32.mxu0 0.0
    %314 = vmatmul.mubr.f32.gmra.mrb[0].mxu0 %v225
    %v315 = vpop.f32.mrb[0].mxu0
    %v316 = vadd.f32 %v247, %v315
    %v317 = vpop.f32.mrb[0].mxu0
    %318 = vdwg.mxu0
    %v319 = vmul.f32 %v316, 0.01
    %v320 = vmax.f32 %v316, %v319
    %v321 = vld [vmem:[#allocation10] sm:$0xff]
    %v322 = vld [vmem:[#allocation10 + $0x8] sm:$0xff]
    %v323 = vld [vmem:[#allocation10 + $0x10] sm:$0xff]
    %v324 = vld [vmem:[#allocation10 + $0x18] sm:$0xff]
    %v325 = vld [vmem:[#allocation10 + $0x20] sm:$0xff]
    %v326 = vld [vmem:[#allocation10 + $0x28] sm:$0xff]
    %v327 = vld [vmem:[#allocation10 + $0x30] sm:$0xff]
    %v328 = vld [vmem:[#allocation10 + $0x38] sm:$0xff]
    %v329 = vld [vmem:[#allocation10 + $0x40] sm:$0xff]
    %v330 = vld [vmem:[#allocation10 + $0x48] sm:$0xff]
    %v331 = vld [vmem:[#allocation10 + $0x50] sm:$0xff]
    %v332 = vld [vmem:[#allocation10 + $0x58] sm:$0xff]
    %v333 = vld [vmem:[#allocation10 + $0x60] sm:$0xff]
    %v334 = vld [vmem:[#allocation10 + $0x68] sm:$0xff]
    %v335 = vld [vmem:[#allocation10 + $0x70] sm:$0xff]
    %v336 = vld [vmem:[#allocation10 + $0x78] sm:$0xff]
    %v337 = vld [vmem:[#allocation11] sm:$0xff]
    %v338 = vld [vmem:[#allocation11 + $0x8] sm:$0xff]
    %v339 = vld [vmem:[#allocation11 + $0x10] sm:$0xff]
    %v340 = vld [vmem:[#allocation11 + $0x18] sm:$0xff]
    %v341 = vld [vmem:[#allocation11 + $0x20] sm:$0xff]
    %v342 = vld [vmem:[#allocation11 + $0x28] sm:$0xff]
    %v343 = vld [vmem:[#allocation11 + $0x30] sm:$0xff]
    %v344 = vld [vmem:[#allocation11 + $0x38] sm:$0xff]
    %v345 = vld [vmem:[#allocation11 + $0x40] sm:$0xff]
    %v346 = vld [vmem:[#allocation11 + $0x48] sm:$0xff]
    %v347 = vld [vmem:[#allocation11 + $0x50] sm:$0xff]
    %v348 = vld [vmem:[#allocation11 + $0x58] sm:$0xff]
    %v349 = vld [vmem:[#allocation11 + $0x60] sm:$0xff]
    %v350 = vld [vmem:[#allocation11 + $0x68] sm:$0xff]
    %v351 = vld [vmem:[#allocation11 + $0x70] sm:$0xff]
    %v352 = vld [vmem:[#allocation11 + $0x78] sm:$0xff]
    %v353 = vld [vmem:[%s8] sm:$0x1]
    %v354 = vld [vmem:[#allocation5] sm:$0xff]
    %355 = vmatprep.subr.mxu0 0.0
    %356 = vmatpush1.msra.mxu0 %v337
    %357 = vmatprep.subr.mxu0 0.0
    %358 = vmatpush1.msra.mxu0 %v338
    %359 = vmatprep.subr.mxu0 0.0
    %360 = vmatpush1.msra.mxu0 %v339
    %361 = vmatprep.subr.mxu0 0.0
    %362 = vmatpush1.msra.mxu0 %v340
    %363 = vmatprep.subr.mxu0 0.0
    %364 = vmatpush1.msra.mxu0 %v341
    %365 = vmatprep.subr.mxu0 0.0
    %366 = vmatpush1.msra.mxu0 %v342
    %367 = vmatprep.subr.mxu0 0.0
    %368 = vmatpush1.msra.mxu0 %v343
    %369 = vmatprep.subr.mxu0 0.0
    %370 = vmatpush1.msra.mxu0 %v344
    %371 = vmatprep.subr.mxu0 0.0
    %372 = vmatpush1.msra.mxu0 %v345
    %373 = vmatprep.subr.mxu0 0.0
    %374 = vmatpush1.msra.mxu0 %v346
    %375 = vmatprep.subr.mxu0 0.0
    %376 = vmatpush1.msra.mxu0 %v347
    %377 = vmatprep.subr.mxu0 0.0
    %378 = vmatpush1.msra.mxu0 %v348
    %379 = vmatprep.subr.mxu0 0.0
    %380 = vmatpush1.msra.mxu0 %v349
    %381 = vmatprep.subr.mxu0 0.0
    %382 = vmatpush1.msra.mxu0 %v350
    %383 = vmatprep.subr.mxu0 0.0
    %384 = vmatpush1.msra.mxu0 %v351
    %385 = vmatprep.subr.mxu0 0.0
    %386 = vmatpush1.msra.mxu0 %v352
    %387 = vmatprep.subr.mxu0 0.0
    %388 = vmatpush1.msra.mxu0 0.0
    %389 = vmatprep.subr.mxu0 0.0
    %390 = vmatpush1.msra.mxu0 0.0
    %391 = vmatprep.subr.mxu0 0.0
    %392 = vmatpush1.msra.mxu0 0.0
    %393 = vmatprep.subr.mxu0 0.0
    %394 = vmatpush1.msra.mxu0 0.0
    %395 = vmatprep.subr.mxu0 0.0
    %396 = vmatpush1.msra.mxu0 0.0
    %397 = vmatprep.subr.mxu0 0.0
    %398 = vmatpush1.msra.mxu0 0.0
    %399 = vmatprep.subr.mxu0 0.0
    %400 = vmatpush1.msra.mxu0 0.0
    %401 = vmatprep.subr.mxu0 0.0
    %402 = vmatpush1.msra.mxu0 0.0
    %403 = vmatprep.subr.mxu0 0.0
    %404 = vmatpush1.msra.mxu0 0.0
    %405 = vmatprep.subr.mxu0 0.0
    %406 = vmatpush1.msra.mxu0 0.0
    %407 = vmatprep.subr.mxu0 0.0
    %408 = vmatpush1.msra.mxu0 0.0
    %409 = vmatprep.subr.mxu0 0.0
    %410 = vmatpush1.msra.mxu0 0.0
    %411 = vmatprep.subr.mxu0 0.0
    %412 = vmatpush1.msra.mxu0 0.0
    %413 = vmatprep.subr.mxu0 0.0
    %414 = vmatpush1.msra.mxu0 0.0
    %415 = vmatprep.subr.mxu0 0.0
    %416 = vmatpush1.msra.mxu0 0.0
    %417 = vmatprep.subr.mxu0 0.0
    %418 = vmatpush1.msra.mxu0 0.0
    %419 = vmatprep.mubr.f32.mxu0 0.0
    %420 = vmatmul.mubr.f32.gmra.mrb[0].mxu0 %v354
    %v421 = vpop.f32.mrb[0].mxu0
    %v422 = vadd.f32 0.0, %v421
    %v423 = vpop.f32.mrb[0].mxu0
    %424 = vdwg.mxu0
    %425 = vmatprep.subr.mxu0 0.0
    %426 = vmatpush1.msra.mxu0 %v321
    %427 = vmatprep.subr.mxu0 0.0
    %428 = vmatpush1.msra.mxu0 %v322
    %429 = vmatprep.subr.mxu0 0.0
    %430 = vmatpush1.msra.mxu0 %v323
    %431 = vmatprep.subr.mxu0 0.0
    %432 = vmatpush1.msra.mxu0 %v324
    %433 = vmatprep.subr.mxu0 0.0
    %434 = vmatpush1.msra.mxu0 %v325
    %435 = vmatprep.subr.mxu0 0.0
    %436 = vmatpush1.msra.mxu0 %v326
    %437 = vmatprep.subr.mxu0 0.0
    %438 = vmatpush1.msra.mxu0 %v327
    %439 = vmatprep.subr.mxu0 0.0
    %440 = vmatpush1.msra.mxu0 %v328
    %441 = vmatprep.subr.mxu0 0.0
    %442 = vmatpush1.msra.mxu0 %v329
    %443 = vmatprep.subr.mxu0 0.0
    %444 = vmatpush1.msra.mxu0 %v330
    %445 = vmatprep.subr.mxu0 0.0
    %446 = vmatpush1.msra.mxu0 %v331
    %447 = vmatprep.subr.mxu0 0.0
    %448 = vmatpush1.msra.mxu0 %v332
    %449 = vmatprep.subr.mxu0 0.0
    %450 = vmatpush1.msra.mxu0 %v333
    %451 = vmatprep.subr.mxu0 0.0
    %452 = vmatpush1.msra.mxu0 %v334
    %453 = vmatprep.subr.mxu0 0.0
    %454 = vmatpush1.msra.mxu0 %v335
    %455 = vmatprep.subr.mxu0 0.0
    %456 = vmatpush1.msra.mxu0 %v336
    %457 = vmatprep.subr.mxu0 0.0
    %458 = vmatpush1.msra.mxu0 0.0
    %459 = vmatprep.subr.mxu0 0.0
    %460 = vmatpush1.msra.mxu0 0.0
    %461 = vmatprep.subr.mxu0 0.0
    %462 = vmatpush1.msra.mxu0 0.0
    %463 = vmatprep.subr.mxu0 0.0
    %464 = vmatpush1.msra.mxu0 0.0
    %465 = vmatprep.subr.mxu0 0.0
    %466 = vmatpush1.msra.mxu0 0.0
    %467 = vmatprep.subr.mxu0 0.0
    %468 = vmatpush1.msra.mxu0 0.0
    %469 = vmatprep.subr.mxu0 0.0
    %470 = vmatpush1.msra.mxu0 0.0
    %471 = vmatprep.subr.mxu0 0.0
    %472 = vmatpush1.msra.mxu0 0.0
    %473 = vmatprep.subr.mxu0 0.0
    %474 = vmatpush1.msra.mxu0 0.0
    %475 = vmatprep.subr.mxu0 0.0
    %476 = vmatpush1.msra.mxu0 0.0
    %477 = vmatprep.subr.mxu0 0.0
    %478 = vmatpush1.msra.mxu0 0.0
    %479 = vmatprep.subr.mxu0 0.0
    %480 = vmatpush1.msra.mxu0 0.0
    %481 = vmatprep.subr.mxu0 0.0
    %482 = vmatpush1.msra.mxu0 0.0
    %483 = vmatprep.subr.mxu0 0.0
    %484 = vmatpush1.msra.mxu0 0.0
    %485 = vmatprep.subr.mxu0 0.0
    %486 = vmatpush1.msra.mxu0 0.0
    %487 = vmatprep.subr.mxu0 0.0
    %488 = vmatpush1.msra.mxu0 0.0
    %489 = vmatprep.mubr.f32.mxu0 0.0
    %490 = vmatmul.mubr.f32.gmra.mrb[0].mxu0 %v320
    %v491 = vpop.f32.mrb[0].mxu0
    %v492 = vadd.f32 %v422, %v491
    %v493 = vpop.f32.mrb[0].mxu0
    %494 = vdwg.mxu0
    %v496 = vlaneseq
    %v497 = vshrl.u32 %v496, 7
    %v498 = vsub.s32 0, %v497
    %v499 = vrot.slane %v353, %v498
    %v501 = vadd.f32 %v492, %v499
    %v502 = vmul.f32 %v501, 0.01
    %v503 = vmax.f32 %v501, %v502
    %v504 = vld [vmem:[#allocation13] sm:$0xff]
    %v505 = vld [vmem:[#allocation13 + $0x8] sm:$0xff]
    %v506 = vld [vmem:[#allocation13 + $0x10] sm:$0xff]
    %v507 = vld [vmem:[#allocation13 + $0x18] sm:$0xff]
    %v508 = vld [vmem:[#allocation13 + $0x20] sm:$0xff]
    %v509 = vld [vmem:[#allocation13 + $0x28] sm:$0xff]
    %v510 = vld [vmem:[#allocation13 + $0x30] sm:$0xff]
    %v511 = vld [vmem:[#allocation13 + $0x38] sm:$0xff]
    %v512 = vld [vmem:[#allocation13 + $0x40] sm:$0xff]
    %v513 = vld [vmem:[#allocation13 + $0x48] sm:$0xff]
    %v514 = vld [vmem:[#allocation13 + $0x50] sm:$0xff]
    %v515 = vld [vmem:[#allocation13 + $0x58] sm:$0xff]
    %v516 = vld [vmem:[#allocation13 + $0x60] sm:$0xff]
    %v517 = vld [vmem:[#allocation13 + $0x68] sm:$0xff]
    %v518 = vld [vmem:[#allocation13 + $0x70] sm:$0xff]
    %v519 = vld [vmem:[#allocation13 + $0x78] sm:$0xff]
    %v520 = vld [vmem:[%s10] sm:$0x1]
    %v522 = vlaneseq
    %v523 = vshrl.u32 %v522, 7
    %v524 = vsub.s32 0, %v523
    %v525 = vrot.slane %v520, %v524
    %527 = vmatprep.subr.mxu0 0.0
    %528 = vmatpush1.msra.mxu0 %v504
    %529 = vmatprep.subr.mxu0 0.0
    %530 = vmatpush1.msra.mxu0 %v505
    %531 = vmatprep.subr.mxu0 0.0
    %532 = vmatpush1.msra.mxu0 %v506
    %533 = vmatprep.subr.mxu0 0.0
    %534 = vmatpush1.msra.mxu0 %v507
    %535 = vmatprep.subr.mxu0 0.0
    %536 = vmatpush1.msra.mxu0 %v508
    %537 = vmatprep.subr.mxu0 0.0
    %538 = vmatpush1.msra.mxu0 %v509
    %539 = vmatprep.subr.mxu0 0.0
    %540 = vmatpush1.msra.mxu0 %v510
    %541 = vmatprep.subr.mxu0 0.0
    %542 = vmatpush1.msra.mxu0 %v511
    %543 = vmatprep.subr.mxu0 0.0
    %544 = vmatpush1.msra.mxu0 %v512
    %545 = vmatprep.subr.mxu0 0.0
    %546 = vmatpush1.msra.mxu0 %v513
    %547 = vmatprep.subr.mxu0 0.0
    %548 = vmatpush1.msra.mxu0 %v514
    %549 = vmatprep.subr.mxu0 0.0
    %550 = vmatpush1.msra.mxu0 %v515
    %551 = vmatprep.subr.mxu0 0.0
    %552 = vmatpush1.msra.mxu0 %v516
    %553 = vmatprep.subr.mxu0 0.0
    %554 = vmatpush1.msra.mxu0 %v517
    %555 = vmatprep.subr.mxu0 0.0
    %556 = vmatpush1.msra.mxu0 %v518
    %557 = vmatprep.subr.mxu0 0.0
    %558 = vmatpush1.msra.mxu0 %v519
    %559 = vmatprep.subr.mxu0 0.0
    %560 = vmatpush1.msra.mxu0 0.0
    %561 = vmatprep.subr.mxu0 0.0
    %562 = vmatpush1.msra.mxu0 0.0
    %563 = vmatprep.subr.mxu0 0.0
    %564 = vmatpush1.msra.mxu0 0.0
    %565 = vmatprep.subr.mxu0 0.0
    %566 = vmatpush1.msra.mxu0 0.0
    %567 = vmatprep.subr.mxu0 0.0
    %568 = vmatpush1.msra.mxu0 0.0
    %569 = vmatprep.subr.mxu0 0.0
    %570 = vmatpush1.msra.mxu0 0.0
    %571 = vmatprep.subr.mxu0 0.0
    %572 = vmatpush1.msra.mxu0 0.0
    %573 = vmatprep.subr.mxu0 0.0
    %574 = vmatpush1.msra.mxu0 0.0
    %575 = vmatprep.subr.mxu0 0.0
    %576 = vmatpush1.msra.mxu0 0.0
    %577 = vmatprep.subr.mxu0 0.0
    %578 = vmatpush1.msra.mxu0 0.0
    %579 = vmatprep.subr.mxu0 0.0
    %580 = vmatpush1.msra.mxu0 0.0
    %581 = vmatprep.subr.mxu0 0.0
    %582 = vmatpush1.msra.mxu0 0.0
    %583 = vmatprep.subr.mxu0 0.0
    %584 = vmatpush1.msra.mxu0 0.0
    %585 = vmatprep.subr.mxu0 0.0
    %586 = vmatpush1.msra.mxu0 0.0
    %587 = vmatprep.subr.mxu0 0.0
    %588 = vmatpush1.msra.mxu0 0.0
    %589 = vmatprep.subr.mxu0 0.0
    %590 = vmatpush1.msra.mxu0 0.0
    %591 = vmatprep.mubr.f32.mxu0 0.0
    %592 = vmatmul.mubr.f32.gmra.mrb[0].mxu0 %v503
    %v593 = vpop.f32.mrb[0].mxu0
    %v594 = vadd.f32 %v525, %v593
    %v595 = vpop.f32.mrb[0].mxu0
    %596 = vdwg.mxu0
    %597 = vst [vmem:[#allocation14] sm:$0xff] %v594
    // Predicated region
    $region74: #{tpu_custom_call.1} parent=1 // pred_check
      _
    $region75: #{tpu_custom_call.1} parent=1 // pred_check_branch
      %599 = sbr.rel (0) target = $region77
    $region76: #{tpu_custom_call.1} parent=1 // pred_region
      %s601 = ssub.s32 128, 128
      %602 = vsyncadd [#allocation4], %s601
      %s604 = sshll.u32 [#allocation14], 4
      %s605 = int_to_ptr.vmem [resolvable:$true] %s604
      %607 = dma.vmem_to_hbm [thread:$0]  %s605, 128, %s11, [#allocation4]
    $region77: #{tpu_custom_call.1} parent=1 // pred_fallthru
      _
    // Predicated region
    $region78: #{tpu_custom_call.1} parent=1 // pred_check
      _
    $region79: #{tpu_custom_call.1} parent=1 // pred_check_branch
      %609 = sbr.rel (0) target = $region81
    $region80: #{tpu_custom_call.1} parent=1 // pred_region
      %610 = dma.done [#allocation4], 128
    $region81: #{tpu_custom_call.1} parent=1 // pred_fallthru
      _
    %611 = vsyncpa [#allocation3], 1
    %612 = vsyncpa [#allocation6], 1
    %613 = vsyncpa [#allocation9], 1
    %614 = vsyncpa [#allocation12], 1
    %615 = vsyncpa [#allocation4], 1

</llo_original>
